<compile_context>
chip_gen: v7x
topology: tpu7x:2x2x1
jax: 0.10.0
libtpu: 0.0.40
codegen_flags: <defaults>
</compile_context>

<pallas_src>
import jax
import jax.numpy as jnp
from jax.experimental import pallas as pl
from jax.experimental.pallas import tpu as pltpu

# ----------------------------- small config ---------------------------------
B = 2                     # batch  (power of two assumed by the mask tricks)
C, H_IMG, W_IMG = 4, 16, 16
CHW = C * H_IMG * W_IMG
TEXT_SEQ = 8              # config.text_seq_length (< latent_dim -> padded)
D = 32                    # config.latent_dim
N_HEADS = 4               # config.prior.n_heads
DH = D // N_HEADS
R_MLP = 4                 # config.prior.r_mlp
N_LAYERS = 2              # config.prior.n_layers
MAX_TIME = 16             # config.prior.max_time
SEQ = 5                   # [captions, text, time, noisy image, learned]
BS = B * SEQ              # flattened token rows (row = token_type * B + batch)
EPS = 1e-5
NEG_INF = -1e30

AUX_W = 3 * D + 2         # [cap_pad | t_sin | noise | sqrt_acp | sqrt_1macp]


# --------------------------- packed-slab layouts -----------------------------
def _make_layouts():
    # weights whose first dim is D
    wd_names = (['t_w1'] + [f'mlp_w1_{l}' for l in range(N_LAYERS)]
                + [f'qkv_{l}' for l in range(N_LAYERS)]
                + ['out_w', 'clip_txt_w'] + [f'wo_{l}' for l in range(N_LAYERS)])
    wd_widths = ([D * R_MLP] + [D * R_MLP] * N_LAYERS + [3 * D] * N_LAYERS
                 + [D, D] + [D] * N_LAYERS)
    wd_col, off = {}, 0
    for n, w in zip(wd_names, wd_widths):
        wd_col[n] = (off, off + w)
        off += w
    wd_total = off

    # weights whose first dim is D * R_MLP
    ww_names = ['t_w2'] + [f'mlp_w2_{l}' for l in range(N_LAYERS)]
    ww_col, off2 = {}, 0
    for n in ww_names:
        ww_col[n] = (off2, off2 + D)
        off2 += D
    ww_total = off2

    # every (1, <=128) vector: biases, LN gains/betas, learned token
    vec_items = ([('clip_img_b', D), ('clip_txt_b', D), ('t_b1', D * R_MLP),
                  ('t_b2', D), ('learned', D), ('out_ln_g', D),
                  ('out_ln_b', D), ('out_b', D)]
                 + [item for l in range(N_LAYERS) for item in
                    [(f'ln1_g_{l}', D), (f'ln1_b_{l}', D), (f'qkv_b_{l}', 3 * D),
                     (f'bo_{l}', D), (f'ln2_g_{l}', D), (f'ln2_b_{l}', D),
                     (f'mlp_b1_{l}', D * R_MLP), (f'mlp_b2_{l}', D)]])
    vec_row = {n: (i, w) for i, (n, w) in enumerate(vec_items)}
    return wd_col, wd_total, ww_col, ww_total, vec_row, len(vec_items)


WD_COL, WD_TOTAL, WW_COL, WW_TOTAL, VEC_ROW, VEC_ROWS = _make_layouts()
VEC_W = max(128, D * R_MLP, 3 * D)


# ------------------------------ kernel helpers ------------------------------
def _layernorm(x, g, b):
    mu = jnp.mean(x, axis=-1, keepdims=True)
    var = jnp.mean((x - mu) ** 2, axis=-1, keepdims=True)
    return (x - mu) * jax.lax.rsqrt(var + EPS) * g + b


# ------------------------------ fused kernel --------------------------------
def fused_prior_kernel(img_ref, aux_ref, wimg_ref, wd_ref, ww_ref, vec_ref,
                       loss_ref):
    f32 = jnp.float32
    bf16 = jnp.bfloat16

    def mm(a, b):
        # bf16 MXU inputs, f32 accumulation; elementwise math stays f32.
        return jnp.dot(a.astype(bf16), b.astype(bf16),
                       preferred_element_type=f32)

    def vrow(name):
        r, w = VEC_ROW[name]
        return vec_ref[r:r + 1, :w]

    def wcol(name):
        a, b = WD_COL[name]
        return wd_ref[:, a:b]

    def wwcol(name):
        a, b = WW_COL[name]
        return ww_ref[:, a:b]

    # --- unpack the per-batch aux slab ---------------------------------------
    aux = aux_ref[...]                               # (B, 3D + 2) f32
    cap_pad = aux[:, 0:D]
    t_sin = aux[:, D:2 * D]
    noise = aux[:, 2 * D:3 * D]
    sa = aux[:, 3 * D:3 * D + 1]
    sb = aux[:, 3 * D + 1:3 * D + 2]

    # --- frozen CLIP encoders (linear stand-ins, see TODO at top) ------------
    img_emb = mm(img_ref[...], wimg_ref[...]) + vrow('clip_img_b')     # (B, D)
    # clip_txt_w is zero-padded on its input rows, so the padded captions give
    # exactly captions @ clip_txt_w (captions are DMA'd once).
    txt_emb = mm(cap_pad, wcol('clip_txt_w')) + vrow('clip_txt_b')

    # --- time MLP -------------------------------------------------------------
    th = mm(t_sin, wcol('t_w1')) + vrow('t_b1')
    th = th * jax.nn.sigmoid(th)                     # SiLU
    t_emb = mm(th, wwcol('t_w2')) + vrow('t_b2')

    # --- forward diffusion of the image embedding ----------------------------
    noisy = sa * img_emb + sb * noise
    learned = jnp.broadcast_to(vrow('learned'), (B, D))

    # --- token slab assembled in registers (row = token_type * B + batch) ----
    x = jnp.concatenate([cap_pad, txt_emb, t_emb, noisy, learned], axis=0)

    # --- per-head lane masks & softmax-denominator matrix (constant) ---------
    lane = jax.lax.broadcasted_iota(jnp.int32, (1, D), 1)
    hm = [jnp.where((lane >= h * DH) & (lane < (h + 1) * DH), 1.0, 0.0
                    ).astype(f32) for h in range(N_HEADS)]
    ones_rep = jnp.concatenate(
        [jnp.broadcast_to(hm[h], (BS, D)) for h in range(N_HEADS)], axis=0)

    # --- additive attention bias, built from iota (no HBM mask DMA) ----------
    # columns are (head, key_token); kk = column's key-token row.
    r2 = jax.lax.broadcasted_iota(jnp.int32, (BS, N_HEADS * BS), 0)
    c2 = jax.lax.broadcasted_iota(jnp.int32, (BS, N_HEADS * BS), 1)
    h_idx = jnp.zeros((BS, N_HEADS * BS), jnp.int32)
    for t in range(1, N_HEADS):
        h_idx = h_idx + (c2 >= t * BS).astype(jnp.int32)
    kk = c2 - BS * h_idx
    # TODO(synk): parity/compare tricks assume B is a power of two (B=2);
    # use // and % for a general batch size.
    same_batch = jnp.bitwise_and(jnp.bitwise_xor(r2, kk), B - 1) == 0
    causal = kk <= r2          # given same batch parity: typ_key <= typ_query
    mask_full = jnp.where(same_batch & causal, 0.0, NEG_INF).astype(f32)

    scale = 1.0 / (DH ** 0.5)

    # --- transformer stack (static unroll over N_LAYERS=2) -------------------
    # TODO(synk): for non-toy batch, switch to (B, SEQ, D) batched attention
    # and a "parallel" batch grid axis (keeps v7x's 2nd TensorCore busy and
    # avoids the O(B^2) flattened score matrix).
    for l in range(N_LAYERS):
        h1 = _layernorm(x, vrow(f'ln1_g_{l}'), vrow(f'ln1_b_{l}'))
        qkv = mm(h1, wcol(f'qkv_{l}')) + vrow(f'qkv_b_{l}')         # (BS, 3D)
        q = qkv[:, 0:D] * scale                                     # scale folded into q
        k = qkv[:, D:2 * D]
        v = qkv[:, 2 * D:3 * D]

        # Head-masked sublane replication of K/V: all heads' scores / PV with
        # single matmuls — no per-head lane slicing, no activation reshapes.
        k_rep = jnp.concatenate([k * hm[h] for h in range(N_HEADS)], axis=0)
        v_rep = jnp.concatenate([v * hm[h] for h in range(N_HEADS)], axis=0)

        s = jax.lax.dot_general(q.astype(jnp.bfloat16),
                                k_rep.astype(jnp.bfloat16),
                                (((1,), (1,)), ((), ())),
                                preferred_element_type=f32)          # (BS, NH*BS)
        s = s + mask_full
        s = s - jnp.max(s, axis=-1, keepdims=True)
        p = jnp.exp(s)

        num = mm(p, v_rep)                       # (BS, D) per-head PV, packed
        den = mm(p, ones_rep)                    # per-head softmax denominators
        attn = num * pl.reciprocal(den + 1e-20, approx=True)

        x = x + mm(attn, wcol(f'wo_{l}')) + vrow(f'bo_{l}')

        h2 = _layernorm(x, vrow(f'ln2_g_{l}'), vrow(f'ln2_b_{l}'))
        m = jax.nn.gelu(mm(h2, wcol(f'mlp_w1_{l}')) + vrow(f'mlp_b1_{l}'))
        x = x + mm(m, wwcol(f'mlp_w2_{l}')) + vrow(f'mlp_b2_{l}')

    # --- output head on the learned tokens (last B rows) + MSE loss ----------
    last = x[(SEQ - 1) * B:BS, :]
    ho = _layernorm(last, vrow('out_ln_g'), vrow('out_ln_b'))
    pred = mm(ho, wcol('out_w')) + vrow('out_b')
    diff = pred - img_emb
    loss_ref[0, 0] = jnp.mean(diff * diff)


# ------------------------------ parameter init ------------------------------
def sinusoidal_table(max_time, dim):
    pos = jnp.arange(max_time, dtype=jnp.float32)[:, None]
    i = jnp.arange(dim // 2, dtype=jnp.float32)[None, :]
    freq = jnp.exp(-jnp.log(10000.0) * (2.0 * i / dim))
    ang = pos * freq
    return jnp.stack([jnp.sin(ang), jnp.cos(ang)], axis=-1).reshape(max_time, dim)


def init_params(key):
    ks = iter(jax.random.split(key, 32))
    nrm = lambda shape, s=0.02: (s * jax.random.normal(next(ks), shape)
                                 ).astype(jnp.float32)

    # --- (D, *) weight slab ---------------------------------------------------
    def set_wd(slab, name, val):
        a, b = WD_COL[name]
        return slab.at[:, a:b].set(val)

    wd = jnp.zeros((D, WD_TOTAL), jnp.float32)
    wd = set_wd(wd, 't_w1', nrm((D, D * R_MLP)))
    for l in range(N_LAYERS):
        wd = set_wd(wd, f'mlp_w1_{l}', nrm((D, D * R_MLP)))
    for l in range(N_LAYERS):
        wd = set_wd(wd, f'qkv_{l}', nrm((D, 3 * D)))
    wd = set_wd(wd, 'out_w', nrm((D, D)))
    clip_txt = jnp.zeros((D, D), jnp.float32).at[:TEXT_SEQ, :].set(
        nrm((TEXT_SEQ, D)))                     # zero-row-padded text weight
    wd = set_wd(wd, 'clip_txt_w', clip_txt)
    for l in range(N_LAYERS):
        wd = set_wd(wd, f'wo_{l}', nrm((D, D)))

    # --- (D*R_MLP, *) weight slab ---------------------------------------------
    def set_ww(slab, name, val):
        a, b = WW_COL[name]
        return slab.at[:, a:b].set(val)

    ww = jnp.zeros((D * R_MLP, WW_TOTAL), jnp.float32)
    ww = set_ww(ww, 't_w2', nrm((D * R_MLP, D)))
    for l in range(N_LAYERS):
        ww = set_ww(ww, f'mlp_w2_{l}', nrm((D * R_MLP, D)))

    w_img = nrm((CHW, D))

    # --- lane-padded vector slab (biases zero, LN gains one, learned token) ---
    def set_vec(slab, name, val):
        r, w = VEC_ROW[name]
        return slab.at[r, :w].set(val.reshape(-1))

    vec = jnp.zeros((VEC_ROWS, VEC_W), jnp.float32)
    vec = set_vec(vec, 'learned',
                  jax.random.normal(next(ks), (D,)).astype(jnp.float32))
    vec = set_vec(vec, 'out_ln_g', jnp.ones((D,), jnp.float32))
    for l in range(N_LAYERS):
        vec = set_vec(vec, f'ln1_g_{l}', jnp.ones((D,), jnp.float32))
        vec = set_vec(vec, f'ln2_g_{l}', jnp.ones((D,), jnp.float32))

    # --- diffusion schedule (linear betas) + sinusoidal table -----------------
    betas = jnp.linspace(1e-4, 0.02, MAX_TIME).astype(jnp.float32)
    acp = jnp.cumprod(1.0 - betas)

    return {
        'w_img': w_img.astype(jnp.bfloat16),     # bf16 MXU path, halves HBM bytes
        'w_d': wd.astype(jnp.bfloat16),
        'w_wide': ww.astype(jnp.bfloat16),
        'vec': vec,
        'sin_table': sinusoidal_table(MAX_TIME, D),
        'sqrt_acp': jnp.sqrt(acp),
        'sqrt_omacp': jnp.sqrt(1.0 - acp),
    }


# ------------------------------ forward pass --------------------------------
def diffusion_prior_forward(params, images, captions, key):
    k_t, k_n = jax.random.split(key)

    img_flat = images.reshape(images.shape[0], -1).astype(jnp.float32)

    cap_f = captions.astype(jnp.float32)
    if TEXT_SEQ >= D:
        cap_pad = cap_f[:, :D]
    else:
        cap_pad = jnp.pad(cap_f, ((0, 0), (0, D - TEXT_SEQ)))

    # timestep sampling + tiny gathers stay in plain JAX (outside the kernel)
    timesteps = jax.random.randint(k_t, (B,), 0, MAX_TIME)
    t_sin = params['sin_table'][timesteps]
    noise = jax.random.normal(k_n, (B, D)).astype(jnp.float32)
    sa = params['sqrt_acp'][timesteps].reshape(B, 1)
    sb = params['sqrt_omacp'][timesteps].reshape(B, 1)

    # single per-batch aux slab -> one DMA for all small per-example data
    aux = jnp.concatenate([cap_pad, t_sin, noise, sa, sb], axis=1)   # (B, 3D+2)

    args = (img_flat, aux, params['w_img'], params['w_d'],
            params['w_wide'], params['vec'])

    # advisory cost estimate so XLA schedules the custom call sensibly
    flops = (2 * B * CHW * D + 2 * B * D * D + 4 * B * D * (D * R_MLP)
             + N_LAYERS * (2 * BS * D * 3 * D
                           + 6 * BS * D * (N_HEADS * BS)
                           + 2 * BS * D * D
                           + 4 * BS * D * (D * R_MLP))
             + 2 * B * D * D)
    transcendentals = (B * D * R_MLP
                       + N_LAYERS * (BS * N_HEADS * BS + BS * D * R_MLP))
    bytes_accessed = sum(int(a.size) * a.dtype.itemsize for a in args) + 4
    cost = pl.CostEstimate(flops=flops, transcendentals=transcendentals,
                           bytes_accessed=bytes_accessed)

    loss = pl.pallas_call(
        fused_prior_kernel,
        out_shape=jax.ShapeDtypeStruct((1, 1), jnp.float32),
        out_specs=pl.BlockSpec(memory_space=pltpu.MemorySpace.SMEM),
        cost_estimate=cost,
    )(*args)
    return loss[0, 0]


# ----------------------------------- main ------------------------------------
if __name__ == "__main__":
    root = jax.random.PRNGKey(0)
    k_param, k_img, k_cap, k_fwd = jax.random.split(root, 4)

    params = init_params(k_param)
    images = jax.random.normal(k_img, (B, C, H_IMG, W_IMG)).astype(jnp.float32)
    captions = jax.random.randint(k_cap, (B, TEXT_SEQ), 0, 100).astype(jnp.float32)

    loss = diffusion_prior_forward(params, images, captions, k_fwd)
    loss = jax.block_until_ready(loss)
    assert loss.shape == () and bool(jnp.isfinite(loss))
    print("KERNEL_OK")
</pallas_src>

<mosaic_0001>
module attributes {stable_mosaic.version = 11 : i64} {
  func.func @fused_prior_kernel(%arg0: memref<2x1024xf32, #tpu.memory_space<vmem>>, %arg1: memref<2x98xf32, #tpu.memory_space<vmem>>, %arg2: memref<1024x32xbf16, #tpu.memory_space<vmem>>, %arg3: memref<32x704xbf16, #tpu.memory_space<vmem>>, %arg4: memref<128x96xbf16, #tpu.memory_space<vmem>>, %arg5: memref<24x128xf32, #tpu.memory_space<vmem>>, %arg6: memref<1x1xf32, #tpu.memory_space<smem>>) attributes {dimension_semantics = [], scalar_prefetch = 0 : i64, scratch_operands = 0 : i64, tpu.core_type = #tpu.core_type<tc>} {
    %c0 = arith.constant 0 : index
    %c0_0 = arith.constant 0 : index
    %0 = vector.load %arg1[%c0, %c0_0] : memref<2x98xf32, #tpu.memory_space<vmem>>, vector<2x98xf32>
    %1 = vector.extract_strided_slice %0 {offsets = [0, 0], sizes = [2, 32], strides = [1, 1]} : vector<2x98xf32> to vector<2x32xf32>
    %2 = vector.extract_strided_slice %0 {offsets = [0, 32], sizes = [2, 32], strides = [1, 1]} : vector<2x98xf32> to vector<2x32xf32>
    %3 = vector.extract_strided_slice %0 {offsets = [0, 64], sizes = [2, 32], strides = [1, 1]} : vector<2x98xf32> to vector<2x32xf32>
    %4 = vector.extract_strided_slice %0 {offsets = [0, 96], sizes = [2, 1], strides = [1, 1]} : vector<2x98xf32> to vector<2x1xf32>
    %5 = vector.extract_strided_slice %0 {offsets = [0, 97], sizes = [2, 1], strides = [1, 1]} : vector<2x98xf32> to vector<2x1xf32>
    %c0_1 = arith.constant 0 : index
    %c0_2 = arith.constant 0 : index
    %6 = vector.load %arg0[%c0_1, %c0_2] : memref<2x1024xf32, #tpu.memory_space<vmem>>, vector<2x1024xf32>
    %c0_3 = arith.constant 0 : index
    %c0_4 = arith.constant 0 : index
    %7 = vector.load %arg2[%c0_3, %c0_4] : memref<1024x32xbf16, #tpu.memory_space<vmem>>, vector<1024x32xbf16>
    %8 = arith.truncf %6 : vector<2x1024xf32> to vector<2x1024xbf16>
    %cst = arith.constant dense<0.000000e+00> : vector<2x32xf32>
    %9 = tpu.matmul %8, %7, %cst {dimension_numbers = #tpu.dot_dimension_numbers<[1], [0], [0], [1], [0, 0, 1, 1], [], []>} : vector<2x1024xbf16>, vector<1024x32xbf16>, vector<2x32xf32> -> vector<2x32xf32>
    %c0_5 = arith.constant 0 : index
    %c0_6 = arith.constant 0 : index
    %10 = vector.load %arg5[%c0_5, %c0_6] : memref<24x128xf32, #tpu.memory_space<vmem>>, vector<1x32xf32>
    %11 = vector.broadcast %10 : vector<1x32xf32> to vector<2x32xf32>
    %12 = arith.addf %9, %11 : vector<2x32xf32>
    %c0_7 = arith.constant 0 : index
    %c608 = arith.constant 608 : index
    %13 = vector.load %arg3[%c0_7, %c608] : memref<32x704xbf16, #tpu.memory_space<vmem>>, vector<32x32xbf16>
    %14 = arith.truncf %1 : vector<2x32xf32> to vector<2x32xbf16>
    %cst_8 = arith.constant dense<0.000000e+00> : vector<2x32xf32>
    %15 = tpu.matmul %14, %13, %cst_8 {dimension_numbers = #tpu.dot_dimension_numbers<[1], [0], [0], [1], [0, 0, 1, 1], [], []>} : vector<2x32xbf16>, vector<32x32xbf16>, vector<2x32xf32> -> vector<2x32xf32>
    %c1 = arith.constant 1 : index
    %c0_9 = arith.constant 0 : index
    %16 = vector.load %arg5[%c1, %c0_9] : memref<24x128xf32, #tpu.memory_space<vmem>>, vector<1x32xf32>
    %17 = vector.broadcast %16 : vector<1x32xf32> to vector<2x32xf32>
    %18 = arith.addf %15, %17 : vector<2x32xf32>
    %c0_10 = arith.constant 0 : index
    %c0_11 = arith.constant 0 : index
    %19 = vector.load %arg3[%c0_10, %c0_11] : memref<32x704xbf16, #tpu.memory_space<vmem>>, vector<32x128xbf16>
    %20 = arith.truncf %2 : vector<2x32xf32> to vector<2x32xbf16>
    %cst_12 = arith.constant dense<0.000000e+00> : vector<2x128xf32>
    %21 = tpu.matmul %20, %19, %cst_12 {dimension_numbers = #tpu.dot_dimension_numbers<[1], [0], [0], [1], [0, 0, 1, 1], [], []>} : vector<2x32xbf16>, vector<32x128xbf16>, vector<2x128xf32> -> vector<2x128xf32>
    %c2 = arith.constant 2 : index
    %c0_13 = arith.constant 0 : index
    %22 = vector.load %arg5[%c2, %c0_13] : memref<24x128xf32, #tpu.memory_space<vmem>>, vector<1x128xf32>
    %23 = vector.broadcast %22 : vector<1x128xf32> to vector<2x128xf32>
    %24 = arith.addf %21, %23 : vector<2x128xf32>
    %25 = arith.negf %24 : vector<2x128xf32>
    %26 = math.exp %25 : vector<2x128xf32>
    %cst_14 = arith.constant 1.000000e+00 : f32
    %27 = vector.broadcast %cst_14 : f32 to vector<2x128xf32>
    %28 = arith.addf %27, %26 : vector<2x128xf32>
    %29 = arith.divf %27, %28 : vector<2x128xf32>
    %30 = arith.mulf %24, %29 : vector<2x128xf32>
    %c0_15 = arith.constant 0 : index
    %c0_16 = arith.constant 0 : index
    %31 = vector.load %arg4[%c0_15, %c0_16] : memref<128x96xbf16, #tpu.memory_space<vmem>>, vector<128x32xbf16>
    %32 = arith.truncf %30 : vector<2x128xf32> to vector<2x128xbf16>
    %cst_17 = arith.constant dense<0.000000e+00> : vector<2x32xf32>
    %33 = tpu.matmul %32, %31, %cst_17 {dimension_numbers = #tpu.dot_dimension_numbers<[1], [0], [0], [1], [0, 0, 1, 1], [], []>} : vector<2x128xbf16>, vector<128x32xbf16>, vector<2x32xf32> -> vector<2x32xf32>
    %c3 = arith.constant 3 : index
    %c0_18 = arith.constant 0 : index
    %34 = vector.load %arg5[%c3, %c0_18] : memref<24x128xf32, #tpu.memory_space<vmem>>, vector<1x32xf32>
    %35 = vector.broadcast %34 : vector<1x32xf32> to vector<2x32xf32>
    %36 = arith.addf %33, %35 : vector<2x32xf32>
    %37 = vector.broadcast %4 : vector<2x1xf32> to vector<2x32xf32>
    %38 = arith.mulf %37, %12 : vector<2x32xf32>
    %39 = vector.broadcast %5 : vector<2x1xf32> to vector<2x32xf32>
    %40 = arith.mulf %39, %3 : vector<2x32xf32>
    %41 = arith.addf %38, %40 : vector<2x32xf32>
    %c4 = arith.constant 4 : index
    %c0_19 = arith.constant 0 : index
    %42 = vector.load %arg5[%c4, %c0_19] : memref<24x128xf32, #tpu.memory_space<vmem>>, vector<1x32xf32>
    %43 = vector.shape_cast %42 : vector<1x32xf32> to vector<1x32xf32>
    %44 = vector.broadcast %43 : vector<1x32xf32> to vector<2x32xf32>
    %45 = tpu.concatenate %1, %18, %36, %41, %44 in 0 : vector<2x32xf32>, vector<2x32xf32>, vector<2x32xf32>, vector<2x32xf32>, vector<2x32xf32> -> vector<10x32xf32>
    %46 = tpu.iota {dimensions = array<i32: 1>} : vector<1x32xi32>
    %c0_i32 = arith.constant 0 : i32
    %47 = vector.broadcast %c0_i32 : i32 to vector<1x32xi32>
    %48 = arith.cmpi sge, %46, %47 : vector<1x32xi32>
    %c8_i32 = arith.constant 8 : i32
    %49 = vector.broadcast %c8_i32 : i32 to vector<1x32xi32>
    %50 = arith.cmpi slt, %46, %49 : vector<1x32xi32>
    %51 = arith.andi %48, %50 : vector<1x32xi1>
    %cst_20 = arith.constant 1.000000e+00 : f32
    %cst_21 = arith.constant 0.000000e+00 : f32
    %52 = vector.broadcast %cst_20 : f32 to vector<1x32xf32>
    %53 = vector.broadcast %cst_21 : f32 to vector<1x32xf32>
    %54 = arith.select %51, %52, %53 : vector<1x32xi1>, vector<1x32xf32>
    %c8_i32_22 = arith.constant 8 : i32
    %55 = vector.broadcast %c8_i32_22 : i32 to vector<1x32xi32>
    %56 = arith.cmpi sge, %46, %55 : vector<1x32xi32>
    %c16_i32 = arith.constant 16 : i32
    %57 = vector.broadcast %c16_i32 : i32 to vector<1x32xi32>
    %58 = arith.cmpi slt, %46, %57 : vector<1x32xi32>
    %59 = arith.andi %56, %58 : vector<1x32xi1>
    %cst_23 = arith.constant 1.000000e+00 : f32
    %cst_24 = arith.constant 0.000000e+00 : f32
    %60 = vector.broadcast %cst_23 : f32 to vector<1x32xf32>
    %61 = vector.broadcast %cst_24 : f32 to vector<1x32xf32>
    %62 = arith.select %59, %60, %61 : vector<1x32xi1>, vector<1x32xf32>
    %c16_i32_25 = arith.constant 16 : i32
    %63 = vector.broadcast %c16_i32_25 : i32 to vector<1x32xi32>
    %64 = arith.cmpi sge, %46, %63 : vector<1x32xi32>
    %c24_i32 = arith.constant 24 : i32
    %65 = vector.broadcast %c24_i32 : i32 to vector<1x32xi32>
    %66 = arith.cmpi slt, %46, %65 : vector<1x32xi32>
    %67 = arith.andi %64, %66 : vector<1x32xi1>
    %cst_26 = arith.constant 1.000000e+00 : f32
    %cst_27 = arith.constant 0.000000e+00 : f32
    %68 = vector.broadcast %cst_26 : f32 to vector<1x32xf32>
    %69 = vector.broadcast %cst_27 : f32 to vector<1x32xf32>
    %70 = arith.select %67, %68, %69 : vector<1x32xi1>, vector<1x32xf32>
    %c24_i32_28 = arith.constant 24 : i32
    %71 = vector.broadcast %c24_i32_28 : i32 to vector<1x32xi32>
    %72 = arith.cmpi sge, %46, %71 : vector<1x32xi32>
    %c32_i32 = arith.constant 32 : i32
    %73 = vector.broadcast %c32_i32 : i32 to vector<1x32xi32>
    %74 = arith.cmpi slt, %46, %73 : vector<1x32xi32>
    %75 = arith.andi %72, %74 : vector<1x32xi1>
    %cst_29 = arith.constant 1.000000e+00 : f32
    %cst_30 = arith.constant 0.000000e+00 : f32
    %76 = vector.broadcast %cst_29 : f32 to vector<1x32xf32>
    %77 = vector.broadcast %cst_30 : f32 to vector<1x32xf32>
    %78 = arith.select %75, %76, %77 : vector<1x32xi1>, vector<1x32xf32>
    %79 = vector.shape_cast %54 : vector<1x32xf32> to vector<1x32xf32>
    %80 = vector.broadcast %79 : vector<1x32xf32> to vector<10x32xf32>
    %81 = vector.shape_cast %62 : vector<1x32xf32> to vector<1x32xf32>
    %82 = vector.broadcast %81 : vector<1x32xf32> to vector<10x32xf32>
    %83 = vector.shape_cast %70 : vector<1x32xf32> to vector<1x32xf32>
    %84 = vector.broadcast %83 : vector<1x32xf32> to vector<10x32xf32>
    %85 = vector.shape_cast %78 : vector<1x32xf32> to vector<1x32xf32>
    %86 = vector.broadcast %85 : vector<1x32xf32> to vector<10x32xf32>
    %87 = tpu.concatenate %80, %82, %84, %86 in 0 : vector<10x32xf32>, vector<10x32xf32>, vector<10x32xf32>, vector<10x32xf32> -> vector<40x32xf32>
    %88 = tpu.iota {dimensions = array<i32: 0>} : vector<10x40xi32>
    %89 = tpu.iota {dimensions = array<i32: 1>} : vector<10x40xi32>
    %c0_i32_31 = arith.constant 0 : i32
    %90 = vector.broadcast %c0_i32_31 : i32 to vector<10x40xi32>
    %c10_i32 = arith.constant 10 : i32
    %91 = vector.broadcast %c10_i32 : i32 to vector<10x40xi32>
    %92 = arith.cmpi sge, %89, %91 : vector<10x40xi32>
    %93 = arith.extui %92 : vector<10x40xi1> to vector<10x40xi32>
    %94 = arith.addi %90, %93 : vector<10x40xi32>
    %c20_i32 = arith.constant 20 : i32
    %95 = vector.broadcast %c20_i32 : i32 to vector<10x40xi32>
    %96 = arith.cmpi sge, %89, %95 : vector<10x40xi32>
    %97 = arith.extui %96 : vector<10x40xi1> to vector<10x40xi32>
    %98 = arith.addi %94, %97 : vector<10x40xi32>
    %c30_i32 = arith.constant 30 : i32
    %99 = vector.broadcast %c30_i32 : i32 to vector<10x40xi32>
    %100 = arith.cmpi sge, %89, %99 : vector<10x40xi32>
    %101 = arith.extui %100 : vector<10x40xi1> to vector<10x40xi32>
    %102 = arith.addi %98, %101 : vector<10x40xi32>
    %c10_i32_32 = arith.constant 10 : i32
    %103 = vector.broadcast %c10_i32_32 : i32 to vector<10x40xi32>
    %104 = arith.muli %103, %102 : vector<10x40xi32>
    %105 = arith.subi %89, %104 : vector<10x40xi32>
    %106 = arith.xori %88, %105 : vector<10x40xi32>
    %c1_i32 = arith.constant 1 : i32
    %107 = vector.broadcast %c1_i32 : i32 to vector<10x40xi32>
    %108 = arith.andi %106, %107 : vector<10x40xi32>
    %c0_i32_33 = arith.constant 0 : i32
    %109 = vector.broadcast %c0_i32_33 : i32 to vector<10x40xi32>
    %110 = arith.cmpi eq, %108, %109 : vector<10x40xi32>
    %111 = arith.cmpi sle, %105, %88 : vector<10x40xi32>
    %112 = arith.andi %110, %111 : vector<10x40xi1>
    %cst_34 = arith.constant 0.000000e+00 : f32
    %cst_35 = arith.constant -1.000000e+30 : f32
    %113 = vector.broadcast %cst_34 : f32 to vector<10x40xf32>
    %114 = vector.broadcast %cst_35 : f32 to vector<10x40xf32>
    %115 = arith.select %112, %113, %114 : vector<10x40xi1>, vector<10x40xf32>
    %c8 = arith.constant 8 : index
    %c0_36 = arith.constant 0 : index
    %116 = vector.load %arg5[%c8, %c0_36] : memref<24x128xf32, #tpu.memory_space<vmem>>, vector<1x32xf32>
    %c9 = arith.constant 9 : index
    %c0_37 = arith.constant 0 : index
    %117 = vector.load %arg5[%c9, %c0_37] : memref<24x128xf32, #tpu.memory_space<vmem>>, vector<1x32xf32>
    %cst_38 = arith.constant dense<0.000000e+00> : vector<10xf32>
    %118 = vector.multi_reduction <add>, %45, %cst_38 [1] : vector<10x32xf32> to vector<10xf32>
    %119 = vector.shape_cast %118 : vector<10xf32> to vector<10x1xf32>
    %cst_39 = arith.constant 3.200000e+01 : f32
    %120 = vector.broadcast %cst_39 : f32 to vector<10x1xf32>
    %121 = arith.divf %119, %120 : vector<10x1xf32>
    %122 = vector.broadcast %121 : vector<10x1xf32> to vector<10x32xf32>
    %123 = arith.subf %45, %122 : vector<10x32xf32>
    %124 = arith.mulf %123, %123 : vector<10x32xf32>
    %cst_40 = arith.constant dense<0.000000e+00> : vector<10xf32>
    %125 = vector.multi_reduction <add>, %124, %cst_40 [1] : vector<10x32xf32> to vector<10xf32>
    %126 = vector.shape_cast %125 : vector<10xf32> to vector<10x1xf32>
    %cst_41 = arith.constant 3.200000e+01 : f32
    %127 = vector.broadcast %cst_41 : f32 to vector<10x1xf32>
    %128 = arith.divf %126, %127 : vector<10x1xf32>
    %129 = vector.broadcast %121 : vector<10x1xf32> to vector<10x32xf32>
    %130 = arith.subf %45, %129 : vector<10x32xf32>
    %cst_42 = arith.constant 9.99999974E-6 : f32
    %131 = vector.broadcast %cst_42 : f32 to vector<10x1xf32>
    %132 = arith.addf %128, %131 : vector<10x1xf32>
    %133 = math.rsqrt %132 : vector<10x1xf32>
    %134 = vector.broadcast %133 : vector<10x1xf32> to vector<10x32xf32>
    %135 = arith.mulf %130, %134 : vector<10x32xf32>
    %136 = vector.broadcast %116 : vector<1x32xf32> to vector<10x32xf32>
    %137 = arith.mulf %135, %136 : vector<10x32xf32>
    %138 = vector.broadcast %117 : vector<1x32xf32> to vector<10x32xf32>
    %139 = arith.addf %137, %138 : vector<10x32xf32>
    %c0_43 = arith.constant 0 : index
    %c384 = arith.constant 384 : index
    %140 = vector.load %arg3[%c0_43, %c384] : memref<32x704xbf16, #tpu.memory_space<vmem>>, vector<32x96xbf16>
    %141 = arith.truncf %139 : vector<10x32xf32> to vector<10x32xbf16>
    %cst_44 = arith.constant dense<0.000000e+00> : vector<10x96xf32>
    %142 = tpu.matmul %141, %140, %cst_44 {dimension_numbers = #tpu.dot_dimension_numbers<[1], [0], [0], [1], [0, 0, 1, 1], [], []>} : vector<10x32xbf16>, vector<32x96xbf16>, vector<10x96xf32> -> vector<10x96xf32>
    %c10 = arith.constant 10 : index
    %c0_45 = arith.constant 0 : index
    %143 = vector.load %arg5[%c10, %c0_45] : memref<24x128xf32, #tpu.memory_space<vmem>>, vector<1x96xf32>
    %144 = vector.broadcast %143 : vector<1x96xf32> to vector<10x96xf32>
    %145 = arith.addf %142, %144 : vector<10x96xf32>
    %146 = vector.extract_strided_slice %145 {offsets = [0, 0], sizes = [10, 32], strides = [1, 1]} : vector<10x96xf32> to vector<10x32xf32>
    %cst_46 = arith.constant 0.353553385 : f32
    %147 = vector.broadcast %cst_46 : f32 to vector<10x32xf32>
    %148 = arith.mulf %146, %147 : vector<10x32xf32>
    %149 = vector.extract_strided_slice %145 {offsets = [0, 32], sizes = [10, 32], strides = [1, 1]} : vector<10x96xf32> to vector<10x32xf32>
    %150 = vector.extract_strided_slice %145 {offsets = [0, 64], sizes = [10, 32], strides = [1, 1]} : vector<10x96xf32> to vector<10x32xf32>
    %151 = vector.broadcast %54 : vector<1x32xf32> to vector<10x32xf32>
    %152 = arith.mulf %149, %151 : vector<10x32xf32>
    %153 = vector.broadcast %62 : vector<1x32xf32> to vector<10x32xf32>
    %154 = arith.mulf %149, %153 : vector<10x32xf32>
    %155 = vector.broadcast %70 : vector<1x32xf32> to vector<10x32xf32>
    %156 = arith.mulf %149, %155 : vector<10x32xf32>
    %157 = vector.broadcast %78 : vector<1x32xf32> to vector<10x32xf32>
    %158 = arith.mulf %149, %157 : vector<10x32xf32>
    %159 = tpu.concatenate %152, %154, %156, %158 in 0 : vector<10x32xf32>, vector<10x32xf32>, vector<10x32xf32>, vector<10x32xf32> -> vector<40x32xf32>
    %160 = vector.broadcast %54 : vector<1x32xf32> to vector<10x32xf32>
    %161 = arith.mulf %150, %160 : vector<10x32xf32>
    %162 = vector.broadcast %62 : vector<1x32xf32> to vector<10x32xf32>
    %163 = arith.mulf %150, %162 : vector<10x32xf32>
    %164 = vector.broadcast %70 : vector<1x32xf32> to vector<10x32xf32>
    %165 = arith.mulf %150, %164 : vector<10x32xf32>
    %166 = vector.broadcast %78 : vector<1x32xf32> to vector<10x32xf32>
    %167 = arith.mulf %150, %166 : vector<10x32xf32>
    %168 = tpu.concatenate %161, %163, %165, %167 in 0 : vector<10x32xf32>, vector<10x32xf32>, vector<10x32xf32>, vector<10x32xf32> -> vector<40x32xf32>
    %169 = arith.truncf %148 : vector<10x32xf32> to vector<10x32xbf16>
    %170 = arith.truncf %159 : vector<40x32xf32> to vector<40x32xbf16>
    %cst_47 = arith.constant dense<0.000000e+00> : vector<10x40xf32>
    %171 = tpu.matmul %169, %170, %cst_47 {dimension_numbers = #tpu.dot_dimension_numbers<[1], [1], [0], [0], [0, 0, 1, 0], [], []>} : vector<10x32xbf16>, vector<40x32xbf16>, vector<10x40xf32> -> vector<10x40xf32>
    %172 = arith.addf %171, %115 : vector<10x40xf32>
    %cst_48 = arith.constant dense<0xFF800000> : vector<10xf32>
    %173 = vector.multi_reduction <maximumf>, %172, %cst_48 [1] : vector<10x40xf32> to vector<10xf32>
    %174 = vector.shape_cast %173 : vector<10xf32> to vector<10x1xf32>
    %175 = vector.broadcast %174 : vector<10x1xf32> to vector<10x40xf32>
    %176 = arith.subf %172, %175 : vector<10x40xf32>
    %177 = math.exp %176 : vector<10x40xf32>
    %178 = arith.truncf %177 : vector<10x40xf32> to vector<10x40xbf16>
    %179 = arith.truncf %168 : vector<40x32xf32> to vector<40x32xbf16>
    %cst_49 = arith.constant dense<0.000000e+00> : vector<10x32xf32>
    %180 = tpu.matmul %178, %179, %cst_49 {dimension_numbers = #tpu.dot_dimension_numbers<[1], [0], [0], [1], [0, 0, 1, 1], [], []>} : vector<10x40xbf16>, vector<40x32xbf16>, vector<10x32xf32> -> vector<10x32xf32>
    %181 = arith.truncf %177 : vector<10x40xf32> to vector<10x40xbf16>
    %182 = arith.truncf %87 : vector<40x32xf32> to vector<40x32xbf16>
    %cst_50 = arith.constant dense<0.000000e+00> : vector<10x32xf32>
    %183 = tpu.matmul %181, %182, %cst_50 {dimension_numbers = #tpu.dot_dimension_numbers<[1], [0], [0], [1], [0, 0, 1, 1], [], []>} : vector<10x40xbf16>, vector<40x32xbf16>, vector<10x32xf32> -> vector<10x32xf32>
    %cst_51 = arith.constant 9.99999968E-21 : f32
    %184 = vector.broadcast %cst_51 : f32 to vector<10x32xf32>
    %185 = arith.addf %183, %184 : vector<10x32xf32>
    %186 = tpu.reciprocal %185 {approx = true} : vector<10x32xf32> -> vector<10x32xf32>
    %187 = arith.mulf %180, %186 : vector<10x32xf32>
    %c0_52 = arith.constant 0 : index
    %c640 = arith.constant 640 : index
    %188 = vector.load %arg3[%c0_52, %c640] : memref<32x704xbf16, #tpu.memory_space<vmem>>, vector<32x32xbf16>
    %189 = arith.truncf %187 : vector<10x32xf32> to vector<10x32xbf16>
    %cst_53 = arith.constant dense<0.000000e+00> : vector<10x32xf32>
    %190 = tpu.matmul %189, %188, %cst_53 {dimension_numbers = #tpu.dot_dimension_numbers<[1], [0], [0], [1], [0, 0, 1, 1], [], []>} : vector<10x32xbf16>, vector<32x32xbf16>, vector<10x32xf32> -> vector<10x32xf32>
    %191 = arith.addf %45, %190 : vector<10x32xf32>
    %c11 = arith.constant 11 : index
    %c0_54 = arith.constant 0 : index
    %192 = vector.load %arg5[%c11, %c0_54] : memref<24x128xf32, #tpu.memory_space<vmem>>, vector<1x32xf32>
    %193 = vector.broadcast %192 : vector<1x32xf32> to vector<10x32xf32>
    %194 = arith.addf %191, %193 : vector<10x32xf32>
    %c12 = arith.constant 12 : index
    %c0_55 = arith.constant 0 : index
    %195 = vector.load %arg5[%c12, %c0_55] : memref<24x128xf32, #tpu.memory_space<vmem>>, vector<1x32xf32>
    %c13 = arith.constant 13 : index
    %c0_56 = arith.constant 0 : index
    %196 = vector.load %arg5[%c13, %c0_56] : memref<24x128xf32, #tpu.memory_space<vmem>>, vector<1x32xf32>
    %cst_57 = arith.constant dense<0.000000e+00> : vector<10xf32>
    %197 = vector.multi_reduction <add>, %194, %cst_57 [1] : vector<10x32xf32> to vector<10xf32>
    %198 = vector.shape_cast %197 : vector<10xf32> to vector<10x1xf32>
    %cst_58 = arith.constant 3.200000e+01 : f32
    %199 = vector.broadcast %cst_58 : f32 to vector<10x1xf32>
    %200 = arith.divf %198, %199 : vector<10x1xf32>
    %201 = vector.broadcast %200 : vector<10x1xf32> to vector<10x32xf32>
    %202 = arith.subf %194, %201 : vector<10x32xf32>
    %203 = arith.mulf %202, %202 : vector<10x32xf32>
    %cst_59 = arith.constant dense<0.000000e+00> : vector<10xf32>
    %204 = vector.multi_reduction <add>, %203, %cst_59 [1] : vector<10x32xf32> to vector<10xf32>
    %205 = vector.shape_cast %204 : vector<10xf32> to vector<10x1xf32>
    %cst_60 = arith.constant 3.200000e+01 : f32
    %206 = vector.broadcast %cst_60 : f32 to vector<10x1xf32>
    %207 = arith.divf %205, %206 : vector<10x1xf32>
    %208 = vector.broadcast %200 : vector<10x1xf32> to vector<10x32xf32>
    %209 = arith.subf %194, %208 : vector<10x32xf32>
    %cst_61 = arith.constant 9.99999974E-6 : f32
    %210 = vector.broadcast %cst_61 : f32 to vector<10x1xf32>
    %211 = arith.addf %207, %210 : vector<10x1xf32>
    %212 = math.rsqrt %211 : vector<10x1xf32>
    %213 = vector.broadcast %212 : vector<10x1xf32> to vector<10x32xf32>
    %214 = arith.mulf %209, %213 : vector<10x32xf32>
    %215 = vector.broadcast %195 : vector<1x32xf32> to vector<10x32xf32>
    %216 = arith.mulf %214, %215 : vector<10x32xf32>
    %217 = vector.broadcast %196 : vector<1x32xf32> to vector<10x32xf32>
    %218 = arith.addf %216, %217 : vector<10x32xf32>
    %c0_62 = arith.constant 0 : index
    %c128 = arith.constant 128 : index
    %219 = vector.load %arg3[%c0_62, %c128] : memref<32x704xbf16, #tpu.memory_space<vmem>>, vector<32x128xbf16>
    %220 = arith.truncf %218 : vector<10x32xf32> to vector<10x32xbf16>
    %cst_63 = arith.constant dense<0.000000e+00> : vector<10x128xf32>
    %221 = tpu.matmul %220, %219, %cst_63 {dimension_numbers = #tpu.dot_dimension_numbers<[1], [0], [0], [1], [0, 0, 1, 1], [], []>} : vector<10x32xbf16>, vector<32x128xbf16>, vector<10x128xf32> -> vector<10x128xf32>
    %c14 = arith.constant 14 : index
    %c0_64 = arith.constant 0 : index
    %222 = vector.load %arg5[%c14, %c0_64] : memref<24x128xf32, #tpu.memory_space<vmem>>, vector<1x128xf32>
    %223 = vector.broadcast %222 : vector<1x128xf32> to vector<10x128xf32>
    %224 = arith.addf %221, %223 : vector<10x128xf32>
    %225 = arith.mulf %224, %224 : vector<10x128xf32>
    %226 = arith.mulf %224, %225 : vector<10x128xf32>
    %cst_65 = arith.constant 4.471500e-02 : f32
    %227 = vector.broadcast %cst_65 : f32 to vector<10x128xf32>
    %228 = arith.mulf %227, %226 : vector<10x128xf32>
    %229 = arith.addf %224, %228 : vector<10x128xf32>
    %cst_66 = arith.constant 0.797884583 : f32
    %230 = vector.broadcast %cst_66 : f32 to vector<10x128xf32>
    %231 = arith.mulf %230, %229 : vector<10x128xf32>
    %232 = math.tanh %231 : vector<10x128xf32>
    %cst_67 = arith.constant 1.000000e+00 : f32
    %233 = vector.broadcast %cst_67 : f32 to vector<10x128xf32>
    %234 = arith.addf %233, %232 : vector<10x128xf32>
    %cst_68 = arith.constant 5.000000e-01 : f32
    %235 = vector.broadcast %cst_68 : f32 to vector<10x128xf32>
    %236 = arith.mulf %235, %234 : vector<10x128xf32>
    %237 = arith.mulf %224, %236 : vector<10x128xf32>
    %c0_69 = arith.constant 0 : index
    %c32 = arith.constant 32 : index
    %238 = vector.load %arg4[%c0_69, %c32] : memref<128x96xbf16, #tpu.memory_space<vmem>>, vector<128x32xbf16>
    %239 = arith.truncf %237 : vector<10x128xf32> to vector<10x128xbf16>
    %cst_70 = arith.constant dense<0.000000e+00> : vector<10x32xf32>
    %240 = tpu.matmul %239, %238, %cst_70 {dimension_numbers = #tpu.dot_dimension_numbers<[1], [0], [0], [1], [0, 0, 1, 1], [], []>} : vector<10x128xbf16>, vector<128x32xbf16>, vector<10x32xf32> -> vector<10x32xf32>
    %241 = arith.addf %194, %240 : vector<10x32xf32>
    %c15 = arith.constant 15 : index
    %c0_71 = arith.constant 0 : index
    %242 = vector.load %arg5[%c15, %c0_71] : memref<24x128xf32, #tpu.memory_space<vmem>>, vector<1x32xf32>
    %243 = vector.broadcast %242 : vector<1x32xf32> to vector<10x32xf32>
    %244 = arith.addf %241, %243 : vector<10x32xf32>
    %c16 = arith.constant 16 : index
    %c0_72 = arith.constant 0 : index
    %245 = vector.load %arg5[%c16, %c0_72] : memref<24x128xf32, #tpu.memory_space<vmem>>, vector<1x32xf32>
    %c17 = arith.constant 17 : index
    %c0_73 = arith.constant 0 : index
    %246 = vector.load %arg5[%c17, %c0_73] : memref<24x128xf32, #tpu.memory_space<vmem>>, vector<1x32xf32>
    %cst_74 = arith.constant dense<0.000000e+00> : vector<10xf32>
    %247 = vector.multi_reduction <add>, %244, %cst_74 [1] : vector<10x32xf32> to vector<10xf32>
    %248 = vector.shape_cast %247 : vector<10xf32> to vector<10x1xf32>
    %cst_75 = arith.constant 3.200000e+01 : f32
    %249 = vector.broadcast %cst_75 : f32 to vector<10x1xf32>
    %250 = arith.divf %248, %249 : vector<10x1xf32>
    %251 = vector.broadcast %250 : vector<10x1xf32> to vector<10x32xf32>
    %252 = arith.subf %244, %251 : vector<10x32xf32>
    %253 = arith.mulf %252, %252 : vector<10x32xf32>
    %cst_76 = arith.constant dense<0.000000e+00> : vector<10xf32>
    %254 = vector.multi_reduction <add>, %253, %cst_76 [1] : vector<10x32xf32> to vector<10xf32>
    %255 = vector.shape_cast %254 : vector<10xf32> to vector<10x1xf32>
    %cst_77 = arith.constant 3.200000e+01 : f32
    %256 = vector.broadcast %cst_77 : f32 to vector<10x1xf32>
    %257 = arith.divf %255, %256 : vector<10x1xf32>
    %258 = vector.broadcast %250 : vector<10x1xf32> to vector<10x32xf32>
    %259 = arith.subf %244, %258 : vector<10x32xf32>
    %cst_78 = arith.constant 9.99999974E-6 : f32
    %260 = vector.broadcast %cst_78 : f32 to vector<10x1xf32>
    %261 = arith.addf %257, %260 : vector<10x1xf32>
    %262 = math.rsqrt %261 : vector<10x1xf32>
    %263 = vector.broadcast %262 : vector<10x1xf32> to vector<10x32xf32>
    %264 = arith.mulf %259, %263 : vector<10x32xf32>
    %265 = vector.broadcast %245 : vector<1x32xf32> to vector<10x32xf32>
    %266 = arith.mulf %264, %265 : vector<10x32xf32>
    %267 = vector.broadcast %246 : vector<1x32xf32> to vector<10x32xf32>
    %268 = arith.addf %266, %267 : vector<10x32xf32>
    %c0_79 = arith.constant 0 : index
    %c480 = arith.constant 480 : index
    %269 = vector.load %arg3[%c0_79, %c480] : memref<32x704xbf16, #tpu.memory_space<vmem>>, vector<32x96xbf16>
    %270 = arith.truncf %268 : vector<10x32xf32> to vector<10x32xbf16>
    %cst_80 = arith.constant dense<0.000000e+00> : vector<10x96xf32>
    %271 = tpu.matmul %270, %269, %cst_80 {dimension_numbers = #tpu.dot_dimension_numbers<[1], [0], [0], [1], [0, 0, 1, 1], [], []>} : vector<10x32xbf16>, vector<32x96xbf16>, vector<10x96xf32> -> vector<10x96xf32>
    %c18 = arith.constant 18 : index
    %c0_81 = arith.constant 0 : index
    %272 = vector.load %arg5[%c18, %c0_81] : memref<24x128xf32, #tpu.memory_space<vmem>>, vector<1x96xf32>
    %273 = vector.broadcast %272 : vector<1x96xf32> to vector<10x96xf32>
    %274 = arith.addf %271, %273 : vector<10x96xf32>
    %275 = vector.extract_strided_slice %274 {offsets = [0, 0], sizes = [10, 32], strides = [1, 1]} : vector<10x96xf32> to vector<10x32xf32>
    %cst_82 = arith.constant 0.353553385 : f32
    %276 = vector.broadcast %cst_82 : f32 to vector<10x32xf32>
    %277 = arith.mulf %275, %276 : vector<10x32xf32>
    %278 = vector.extract_strided_slice %274 {offsets = [0, 32], sizes = [10, 32], strides = [1, 1]} : vector<10x96xf32> to vector<10x32xf32>
    %279 = vector.extract_strided_slice %274 {offsets = [0, 64], sizes = [10, 32], strides = [1, 1]} : vector<10x96xf32> to vector<10x32xf32>
    %280 = vector.broadcast %54 : vector<1x32xf32> to vector<10x32xf32>
    %281 = arith.mulf %278, %280 : vector<10x32xf32>
    %282 = vector.broadcast %62 : vector<1x32xf32> to vector<10x32xf32>
    %283 = arith.mulf %278, %282 : vector<10x32xf32>
    %284 = vector.broadcast %70 : vector<1x32xf32> to vector<10x32xf32>
    %285 = arith.mulf %278, %284 : vector<10x32xf32>
    %286 = vector.broadcast %78 : vector<1x32xf32> to vector<10x32xf32>
    %287 = arith.mulf %278, %286 : vector<10x32xf32>
    %288 = tpu.concatenate %281, %283, %285, %287 in 0 : vector<10x32xf32>, vector<10x32xf32>, vector<10x32xf32>, vector<10x32xf32> -> vector<40x32xf32>
    %289 = vector.broadcast %54 : vector<1x32xf32> to vector<10x32xf32>
    %290 = arith.mulf %279, %289 : vector<10x32xf32>
    %291 = vector.broadcast %62 : vector<1x32xf32> to vector<10x32xf32>
    %292 = arith.mulf %279, %291 : vector<10x32xf32>
    %293 = vector.broadcast %70 : vector<1x32xf32> to vector<10x32xf32>
    %294 = arith.mulf %279, %293 : vector<10x32xf32>
    %295 = vector.broadcast %78 : vector<1x32xf32> to vector<10x32xf32>
    %296 = arith.mulf %279, %295 : vector<10x32xf32>
    %297 = tpu.concatenate %290, %292, %294, %296 in 0 : vector<10x32xf32>, vector<10x32xf32>, vector<10x32xf32>, vector<10x32xf32> -> vector<40x32xf32>
    %298 = arith.truncf %277 : vector<10x32xf32> to vector<10x32xbf16>
    %299 = arith.truncf %288 : vector<40x32xf32> to vector<40x32xbf16>
    %cst_83 = arith.constant dense<0.000000e+00> : vector<10x40xf32>
    %300 = tpu.matmul %298, %299, %cst_83 {dimension_numbers = #tpu.dot_dimension_numbers<[1], [1], [0], [0], [0, 0, 1, 0], [], []>} : vector<10x32xbf16>, vector<40x32xbf16>, vector<10x40xf32> -> vector<10x40xf32>
    %301 = arith.addf %300, %115 : vector<10x40xf32>
    %cst_84 = arith.constant dense<0xFF800000> : vector<10xf32>
    %302 = vector.multi_reduction <maximumf>, %301, %cst_84 [1] : vector<10x40xf32> to vector<10xf32>
    %303 = vector.shape_cast %302 : vector<10xf32> to vector<10x1xf32>
    %304 = vector.broadcast %303 : vector<10x1xf32> to vector<10x40xf32>
    %305 = arith.subf %301, %304 : vector<10x40xf32>
    %306 = math.exp %305 : vector<10x40xf32>
    %307 = arith.truncf %306 : vector<10x40xf32> to vector<10x40xbf16>
    %308 = arith.truncf %297 : vector<40x32xf32> to vector<40x32xbf16>
    %cst_85 = arith.constant dense<0.000000e+00> : vector<10x32xf32>
    %309 = tpu.matmul %307, %308, %cst_85 {dimension_numbers = #tpu.dot_dimension_numbers<[1], [0], [0], [1], [0, 0, 1, 1], [], []>} : vector<10x40xbf16>, vector<40x32xbf16>, vector<10x32xf32> -> vector<10x32xf32>
    %310 = arith.truncf %306 : vector<10x40xf32> to vector<10x40xbf16>
    %311 = arith.truncf %87 : vector<40x32xf32> to vector<40x32xbf16>
    %cst_86 = arith.constant dense<0.000000e+00> : vector<10x32xf32>
    %312 = tpu.matmul %310, %311, %cst_86 {dimension_numbers = #tpu.dot_dimension_numbers<[1], [0], [0], [1], [0, 0, 1, 1], [], []>} : vector<10x40xbf16>, vector<40x32xbf16>, vector<10x32xf32> -> vector<10x32xf32>
    %cst_87 = arith.constant 9.99999968E-21 : f32
    %313 = vector.broadcast %cst_87 : f32 to vector<10x32xf32>
    %314 = arith.addf %312, %313 : vector<10x32xf32>
    %315 = tpu.reciprocal %314 {approx = true} : vector<10x32xf32> -> vector<10x32xf32>
    %316 = arith.mulf %309, %315 : vector<10x32xf32>
    %c0_88 = arith.constant 0 : index
    %c672 = arith.constant 672 : index
    %317 = vector.load %arg3[%c0_88, %c672] : memref<32x704xbf16, #tpu.memory_space<vmem>>, vector<32x32xbf16>
    %318 = arith.truncf %316 : vector<10x32xf32> to vector<10x32xbf16>
    %cst_89 = arith.constant dense<0.000000e+00> : vector<10x32xf32>
    %319 = tpu.matmul %318, %317, %cst_89 {dimension_numbers = #tpu.dot_dimension_numbers<[1], [0], [0], [1], [0, 0, 1, 1], [], []>} : vector<10x32xbf16>, vector<32x32xbf16>, vector<10x32xf32> -> vector<10x32xf32>
    %320 = arith.addf %244, %319 : vector<10x32xf32>
    %c19 = arith.constant 19 : index
    %c0_90 = arith.constant 0 : index
    %321 = vector.load %arg5[%c19, %c0_90] : memref<24x128xf32, #tpu.memory_space<vmem>>, vector<1x32xf32>
    %322 = vector.broadcast %321 : vector<1x32xf32> to vector<10x32xf32>
    %323 = arith.addf %320, %322 : vector<10x32xf32>
    %c20 = arith.constant 20 : index
    %c0_91 = arith.constant 0 : index
    %324 = vector.load %arg5[%c20, %c0_91] : memref<24x128xf32, #tpu.memory_space<vmem>>, vector<1x32xf32>
    %c21 = arith.constant 21 : index
    %c0_92 = arith.constant 0 : index
    %325 = vector.load %arg5[%c21, %c0_92] : memref<24x128xf32, #tpu.memory_space<vmem>>, vector<1x32xf32>
    %cst_93 = arith.constant dense<0.000000e+00> : vector<10xf32>
    %326 = vector.multi_reduction <add>, %323, %cst_93 [1] : vector<10x32xf32> to vector<10xf32>
    %327 = vector.shape_cast %326 : vector<10xf32> to vector<10x1xf32>
    %cst_94 = arith.constant 3.200000e+01 : f32
    %328 = vector.broadcast %cst_94 : f32 to vector<10x1xf32>
    %329 = arith.divf %327, %328 : vector<10x1xf32>
    %330 = vector.broadcast %329 : vector<10x1xf32> to vector<10x32xf32>
    %331 = arith.subf %323, %330 : vector<10x32xf32>
    %332 = arith.mulf %331, %331 : vector<10x32xf32>
    %cst_95 = arith.constant dense<0.000000e+00> : vector<10xf32>
    %333 = vector.multi_reduction <add>, %332, %cst_95 [1] : vector<10x32xf32> to vector<10xf32>
    %334 = vector.shape_cast %333 : vector<10xf32> to vector<10x1xf32>
    %cst_96 = arith.constant 3.200000e+01 : f32
    %335 = vector.broadcast %cst_96 : f32 to vector<10x1xf32>
    %336 = arith.divf %334, %335 : vector<10x1xf32>
    %337 = vector.broadcast %329 : vector<10x1xf32> to vector<10x32xf32>
    %338 = arith.subf %323, %337 : vector<10x32xf32>
    %cst_97 = arith.constant 9.99999974E-6 : f32
    %339 = vector.broadcast %cst_97 : f32 to vector<10x1xf32>
    %340 = arith.addf %336, %339 : vector<10x1xf32>
    %341 = math.rsqrt %340 : vector<10x1xf32>
    %342 = vector.broadcast %341 : vector<10x1xf32> to vector<10x32xf32>
    %343 = arith.mulf %338, %342 : vector<10x32xf32>
    %344 = vector.broadcast %324 : vector<1x32xf32> to vector<10x32xf32>
    %345 = arith.mulf %343, %344 : vector<10x32xf32>
    %346 = vector.broadcast %325 : vector<1x32xf32> to vector<10x32xf32>
    %347 = arith.addf %345, %346 : vector<10x32xf32>
    %c0_98 = arith.constant 0 : index
    %c256 = arith.constant 256 : index
    %348 = vector.load %arg3[%c0_98, %c256] : memref<32x704xbf16, #tpu.memory_space<vmem>>, vector<32x128xbf16>
    %349 = arith.truncf %347 : vector<10x32xf32> to vector<10x32xbf16>
    %cst_99 = arith.constant dense<0.000000e+00> : vector<10x128xf32>
    %350 = tpu.matmul %349, %348, %cst_99 {dimension_numbers = #tpu.dot_dimension_numbers<[1], [0], [0], [1], [0, 0, 1, 1], [], []>} : vector<10x32xbf16>, vector<32x128xbf16>, vector<10x128xf32> -> vector<10x128xf32>
    %c22 = arith.constant 22 : index
    %c0_100 = arith.constant 0 : index
    %351 = vector.load %arg5[%c22, %c0_100] : memref<24x128xf32, #tpu.memory_space<vmem>>, vector<1x128xf32>
    %352 = vector.broadcast %351 : vector<1x128xf32> to vector<10x128xf32>
    %353 = arith.addf %350, %352 : vector<10x128xf32>
    %354 = arith.mulf %353, %353 : vector<10x128xf32>
    %355 = arith.mulf %353, %354 : vector<10x128xf32>
    %cst_101 = arith.constant 4.471500e-02 : f32
    %356 = vector.broadcast %cst_101 : f32 to vector<10x128xf32>
    %357 = arith.mulf %356, %355 : vector<10x128xf32>
    %358 = arith.addf %353, %357 : vector<10x128xf32>
    %cst_102 = arith.constant 0.797884583 : f32
    %359 = vector.broadcast %cst_102 : f32 to vector<10x128xf32>
    %360 = arith.mulf %359, %358 : vector<10x128xf32>
    %361 = math.tanh %360 : vector<10x128xf32>
    %cst_103 = arith.constant 1.000000e+00 : f32
    %362 = vector.broadcast %cst_103 : f32 to vector<10x128xf32>
    %363 = arith.addf %362, %361 : vector<10x128xf32>
    %cst_104 = arith.constant 5.000000e-01 : f32
    %364 = vector.broadcast %cst_104 : f32 to vector<10x128xf32>
    %365 = arith.mulf %364, %363 : vector<10x128xf32>
    %366 = arith.mulf %353, %365 : vector<10x128xf32>
    %c0_105 = arith.constant 0 : index
    %c64 = arith.constant 64 : index
    %367 = vector.load %arg4[%c0_105, %c64] : memref<128x96xbf16, #tpu.memory_space<vmem>>, vector<128x32xbf16>
    %368 = arith.truncf %366 : vector<10x128xf32> to vector<10x128xbf16>
    %cst_106 = arith.constant dense<0.000000e+00> : vector<10x32xf32>
    %369 = tpu.matmul %368, %367, %cst_106 {dimension_numbers = #tpu.dot_dimension_numbers<[1], [0], [0], [1], [0, 0, 1, 1], [], []>} : vector<10x128xbf16>, vector<128x32xbf16>, vector<10x32xf32> -> vector<10x32xf32>
    %370 = arith.addf %323, %369 : vector<10x32xf32>
    %c23 = arith.constant 23 : index
    %c0_107 = arith.constant 0 : index
    %371 = vector.load %arg5[%c23, %c0_107] : memref<24x128xf32, #tpu.memory_space<vmem>>, vector<1x32xf32>
    %372 = vector.broadcast %371 : vector<1x32xf32> to vector<10x32xf32>
    %373 = arith.addf %370, %372 : vector<10x32xf32>
    %374 = vector.extract_strided_slice %373 {offsets = [8, 0], sizes = [2, 32], strides = [1, 1]} : vector<10x32xf32> to vector<2x32xf32>
    %c5 = arith.constant 5 : index
    %c0_108 = arith.constant 0 : index
    %375 = vector.load %arg5[%c5, %c0_108] : memref<24x128xf32, #tpu.memory_space<vmem>>, vector<1x32xf32>
    %c6 = arith.constant 6 : index
    %c0_109 = arith.constant 0 : index
    %376 = vector.load %arg5[%c6, %c0_109] : memref<24x128xf32, #tpu.memory_space<vmem>>, vector<1x32xf32>
    %cst_110 = arith.constant dense<0.000000e+00> : vector<2xf32>
    %377 = vector.multi_reduction <add>, %374, %cst_110 [1] : vector<2x32xf32> to vector<2xf32>
    %378 = vector.shape_cast %377 : vector<2xf32> to vector<2x1xf32>
    %cst_111 = arith.constant 3.200000e+01 : f32
    %379 = vector.broadcast %cst_111 : f32 to vector<2x1xf32>
    %380 = arith.divf %378, %379 : vector<2x1xf32>
    %381 = vector.broadcast %380 : vector<2x1xf32> to vector<2x32xf32>
    %382 = arith.subf %374, %381 : vector<2x32xf32>
    %383 = arith.mulf %382, %382 : vector<2x32xf32>
    %cst_112 = arith.constant dense<0.000000e+00> : vector<2xf32>
    %384 = vector.multi_reduction <add>, %383, %cst_112 [1] : vector<2x32xf32> to vector<2xf32>
    %385 = vector.shape_cast %384 : vector<2xf32> to vector<2x1xf32>
    %cst_113 = arith.constant 3.200000e+01 : f32
    %386 = vector.broadcast %cst_113 : f32 to vector<2x1xf32>
    %387 = arith.divf %385, %386 : vector<2x1xf32>
    %388 = vector.broadcast %380 : vector<2x1xf32> to vector<2x32xf32>
    %389 = arith.subf %374, %388 : vector<2x32xf32>
    %cst_114 = arith.constant 9.99999974E-6 : f32
    %390 = vector.broadcast %cst_114 : f32 to vector<2x1xf32>
    %391 = arith.addf %387, %390 : vector<2x1xf32>
    %392 = math.rsqrt %391 : vector<2x1xf32>
    %393 = vector.broadcast %392 : vector<2x1xf32> to vector<2x32xf32>
    %394 = arith.mulf %389, %393 : vector<2x32xf32>
    %395 = vector.broadcast %375 : vector<1x32xf32> to vector<2x32xf32>
    %396 = arith.mulf %394, %395 : vector<2x32xf32>
    %397 = vector.broadcast %376 : vector<1x32xf32> to vector<2x32xf32>
    %398 = arith.addf %396, %397 : vector<2x32xf32>
    %c0_115 = arith.constant 0 : index
    %c576 = arith.constant 576 : index
    %399 = vector.load %arg3[%c0_115, %c576] : memref<32x704xbf16, #tpu.memory_space<vmem>>, vector<32x32xbf16>
    %400 = arith.truncf %398 : vector<2x32xf32> to vector<2x32xbf16>
    %cst_116 = arith.constant dense<0.000000e+00> : vector<2x32xf32>
    %401 = tpu.matmul %400, %399, %cst_116 {dimension_numbers = #tpu.dot_dimension_numbers<[1], [0], [0], [1], [0, 0, 1, 1], [], []>} : vector<2x32xbf16>, vector<32x32xbf16>, vector<2x32xf32> -> vector<2x32xf32>
    %c7 = arith.constant 7 : index
    %c0_117 = arith.constant 0 : index
    %402 = vector.load %arg5[%c7, %c0_117] : memref<24x128xf32, #tpu.memory_space<vmem>>, vector<1x32xf32>
    %403 = vector.broadcast %402 : vector<1x32xf32> to vector<2x32xf32>
    %404 = arith.addf %401, %403 : vector<2x32xf32>
    %405 = arith.subf %404, %12 : vector<2x32xf32>
    %406 = arith.mulf %405, %405 : vector<2x32xf32>
    %407 = vector.shape_cast %406 : vector<2x32xf32> to vector<1x2x32xf32>
    %cst_118 = arith.constant dense<0.000000e+00> : vector<1xf32>
    %408 = vector.multi_reduction <add>, %407, %cst_118 [1, 2] : vector<1x2x32xf32> to vector<1xf32>
    %409 = vector.shape_cast %408 : vector<1xf32> to vector<1x1x1xf32>
    %410 = vector.extract %409[0, 0, 0] : f32 from vector<1x1x1xf32>
    %cst_119 = arith.constant 6.400000e+01 : f32
    %411 = arith.divf %410, %cst_119 : f32
    %c0_120 = arith.constant 0 : index
    %c0_121 = arith.constant 0 : index
    %412 = memref.load %arg6[%c0_120, %c0_121] : memref<1x1xf32, #tpu.memory_space<smem>>
    memref.store %411, %arg6[%c0_120, %c0_121] : memref<1x1xf32, #tpu.memory_space<smem>>
    return
  }
}

</mosaic_0001>

<llo_original>
// kernel: tpu_custom_call.1
$region0: #{tpu_custom_call.1}
  #allocation0 [shape = 'u32[]', space=smem, size = 0x4, offset = 0x4, fixed_abs, tag = 'smem constant byte address 0x4 - core index']
  #allocation1 [shape = 'u32[144,128]{1,0:T(1,128)}', space=vmem, size = 0x12000, scoped, tag = 'internal scratch']
  %s0 = inlined_call_operand.vmem [shape: f32[2,1024], index: 0, kind: input, shape index: {}]
  %s1 = inlined_call_operand.vmem [shape: f32[2,98], index: 1, kind: input, shape index: {}]
  %s2 = inlined_call_operand.vmem [shape: bf16[1024,32], index: 2, kind: input, shape index: {}]
  %s3 = inlined_call_operand.vmem [shape: bf16[32,704], index: 3, kind: input, shape index: {}]
  %s4 = inlined_call_operand.vmem [shape: bf16[128,96], index: 4, kind: input, shape index: {}]
  %s5 = inlined_call_operand.vmem [shape: f32[24,128], index: 5, kind: input, shape index: {}]
  %s6 = inlined_call_operand.hbm [shape: f32[1,1], index: 6, kind: output, shape index: {}]
  %s7 = sld [smem:[#allocation0]]
  $region34: #{tpu_custom_call.1} parent=0
    _
  %s9 = ssub.s32 1, %s7
  %s10 = scalar_select 0, %s9, %s7
  $region1: #{tpu_custom_call.1} parent=0
    #allocation2 [shape = 'u8[512]{0}', space=smem, size = 0x200, scoped, tag = 'output window, operand 0, single buffered']
    #allocation3 [shape = 's32[1]{0}', space=sflag, size = 0x4, scoped, tag = 'scoped memory for tpu_custom_call.1']
    %11 = vsyncpa [#allocation3], 0
    // Predicated region
    $region2: #{tpu_custom_call.1} parent=1 // pred_check
      _
    $region3: #{tpu_custom_call.1} parent=1 // pred_check_branch
      %13 = sbr.rel (0) target = $region5
    $region4: #{tpu_custom_call.1} parent=1 // pred_region
      _
    $region5: #{tpu_custom_call.1} parent=1 // pred_fallthru
      _
    // Predicated region
    $region6: #{tpu_custom_call.1} parent=1 // pred_check
      _
    $region7: #{tpu_custom_call.1} parent=1 // pred_check_branch
      %15 = sbr.rel (0) target = $region9
    $region8: #{tpu_custom_call.1} parent=1 // pred_region
      _
    $region9: #{tpu_custom_call.1} parent=1 // pred_fallthru
      _
    // Predicated region
    $region10: #{tpu_custom_call.1} parent=1 // pred_check
      _
    $region11: #{tpu_custom_call.1} parent=1 // pred_check_branch
      %17 = sbr.rel (0) target = $region13
    $region12: #{tpu_custom_call.1} parent=1 // pred_region
      _
    $region13: #{tpu_custom_call.1} parent=1 // pred_fallthru
      _
    // Predicated region
    $region14: #{tpu_custom_call.1} parent=1 // pred_check
      _
    $region15: #{tpu_custom_call.1} parent=1 // pred_check_branch
      %19 = sbr.rel (0) target = $region17
    $region16: #{tpu_custom_call.1} parent=1 // pred_region
      _
    $region17: #{tpu_custom_call.1} parent=1 // pred_fallthru
      _
    // Predicated region
    $region18: #{tpu_custom_call.1} parent=1 // pred_check
      _
    $region19: #{tpu_custom_call.1} parent=1 // pred_check_branch
      %21 = sbr.rel (0) target = $region21
    $region20: #{tpu_custom_call.1} parent=1 // pred_region
      _
    $region21: #{tpu_custom_call.1} parent=1 // pred_fallthru
      _
    // Predicated region
    $region22: #{tpu_custom_call.1} parent=1 // pred_check
      _
    $region23: #{tpu_custom_call.1} parent=1 // pred_check_branch
      %23 = sbr.rel (0) target = $region25
    $region24: #{tpu_custom_call.1} parent=1 // pred_region
      _
    $region25: #{tpu_custom_call.1} parent=1 // pred_fallthru
      _
    %v25 = vld [vmem:[%s1] sm:$0x3]
    %v26 = vld [vmem:[%s0] sm:$0xff]
    %v27 = vld [vmem:[%s0 + $0x8] sm:$0xff]
    %v28 = vld [vmem:[%s2] sm:$0xf]
    %v29 = vld [vmem:[%s2 + $0x4] sm:$0xf]
    %v30 = vld [vmem:[%s2 + $0x8] sm:$0xf]
    %v31 = vld [vmem:[%s2 + $0xc] sm:$0xf]
    %v32 = vld [vmem:[%s2 + $0x10] sm:$0xf]
    %v33 = vld [vmem:[%s2 + $0x14] sm:$0xf]
    %v34 = vld [vmem:[%s2 + $0x18] sm:$0xf]
    %v35 = vld [vmem:[%s2 + $0x1c] sm:$0xf]
    %v36 = vld [vmem:[%s2 + $0x20] sm:$0xf]
    %v37 = vld [vmem:[%s2 + $0x24] sm:$0xf]
    %v38 = vld [vmem:[%s2 + $0x28] sm:$0xf]
    %v39 = vld [vmem:[%s2 + $0x2c] sm:$0xf]
    %v40 = vld [vmem:[%s2 + $0x30] sm:$0xf]
    %v41 = vld [vmem:[%s2 + $0x34] sm:$0xf]
    %v42 = vld [vmem:[%s2 + $0x38] sm:$0xf]
    %v43 = vld [vmem:[%s2 + $0x3c] sm:$0xf]
    %v44 = vld [vmem:[%s2 + $0x40] sm:$0xf]
    %v45 = vld [vmem:[%s2 + $0x44] sm:$0xf]
    %v46 = vld [vmem:[%s2 + $0x48] sm:$0xf]
    %v47 = vld [vmem:[%s2 + $0x4c] sm:$0xf]
    %v48 = vld [vmem:[%s2 + $0x50] sm:$0xf]
    %v49 = vld [vmem:[%s2 + $0x54] sm:$0xf]
    %v50 = vld [vmem:[%s2 + $0x58] sm:$0xf]
    %v51 = vld [vmem:[%s2 + $0x5c] sm:$0xf]
    %v52 = vld [vmem:[%s2 + $0x60] sm:$0xf]
    %v53 = vld [vmem:[%s2 + $0x64] sm:$0xf]
    %v54 = vld [vmem:[%s2 + $0x68] sm:$0xf]
    %v55 = vld [vmem:[%s2 + $0x6c] sm:$0xf]
    %v56 = vld [vmem:[%s2 + $0x70] sm:$0xf]
    %v57 = vld [vmem:[%s2 + $0x74] sm:$0xf]
    %v58 = vld [vmem:[%s2 + $0x78] sm:$0xf]
    %v59 = vld [vmem:[%s2 + $0x7c] sm:$0xf]
    %v60 = vld [vmem:[%s2 + $0x80] sm:$0xf]
    %v61 = vld [vmem:[%s2 + $0x84] sm:$0xf]
    %v62 = vld [vmem:[%s2 + $0x88] sm:$0xf]
    %v63 = vld [vmem:[%s2 + $0x8c] sm:$0xf]
    %v64 = vld [vmem:[%s2 + $0x90] sm:$0xf]
    %v65 = vld [vmem:[%s2 + $0x94] sm:$0xf]
    %v66 = vld [vmem:[%s2 + $0x98] sm:$0xf]
    %v67 = vld [vmem:[%s2 + $0x9c] sm:$0xf]
    %v68 = vld [vmem:[%s2 + $0xa0] sm:$0xf]
    %v69 = vld [vmem:[%s2 + $0xa4] sm:$0xf]
    %v70 = vld [vmem:[%s2 + $0xa8] sm:$0xf]
    %v71 = vld [vmem:[%s2 + $0xac] sm:$0xf]
    %v72 = vld [vmem:[%s2 + $0xb0] sm:$0xf]
    %v73 = vld [vmem:[%s2 + $0xb4] sm:$0xf]
    %v74 = vld [vmem:[%s2 + $0xb8] sm:$0xf]
    %v75 = vld [vmem:[%s2 + $0xbc] sm:$0xf]
    %v76 = vld [vmem:[%s2 + $0xc0] sm:$0xf]
    %v77 = vld [vmem:[%s2 + $0xc4] sm:$0xf]
    %v78 = vld [vmem:[%s2 + $0xc8] sm:$0xf]
    %v79 = vld [vmem:[%s2 + $0xcc] sm:$0xf]
    %v80 = vld [vmem:[%s2 + $0xd0] sm:$0xf]
    %v81 = vld [vmem:[%s2 + $0xd4] sm:$0xf]
    %v82 = vld [vmem:[%s2 + $0xd8] sm:$0xf]
    %v83 = vld [vmem:[%s2 + $0xdc] sm:$0xf]
    %v84 = vld [vmem:[%s2 + $0xe0] sm:$0xf]
    %v85 = vld [vmem:[%s2 + $0xe4] sm:$0xf]
    %v86 = vld [vmem:[%s2 + $0xe8] sm:$0xf]
    %v87 = vld [vmem:[%s2 + $0xec] sm:$0xf]
    %v88 = vld [vmem:[%s2 + $0xf0] sm:$0xf]
    %v89 = vld [vmem:[%s2 + $0xf4] sm:$0xf]
    %v90 = vld [vmem:[%s2 + $0xf8] sm:$0xf]
    %v91 = vld [vmem:[%s2 + $0xfc] sm:$0xf]
    %v92 = vld [vmem:[%s2 + $0x100] sm:$0xf]
    %v93 = vld [vmem:[%s2 + $0x104] sm:$0xf]
    %v94 = vld [vmem:[%s2 + $0x108] sm:$0xf]
    %v95 = vld [vmem:[%s2 + $0x10c] sm:$0xf]
    %v96 = vld [vmem:[%s2 + $0x110] sm:$0xf]
    %v97 = vld [vmem:[%s2 + $0x114] sm:$0xf]
    %v98 = vld [vmem:[%s2 + $0x118] sm:$0xf]
    %v99 = vld [vmem:[%s2 + $0x11c] sm:$0xf]
    %v100 = vld [vmem:[%s2 + $0x120] sm:$0xf]
    %v101 = vld [vmem:[%s2 + $0x124] sm:$0xf]
    %v102 = vld [vmem:[%s2 + $0x128] sm:$0xf]
    %v103 = vld [vmem:[%s2 + $0x12c] sm:$0xf]
    %v104 = vld [vmem:[%s2 + $0x130] sm:$0xf]
    %v105 = vld [vmem:[%s2 + $0x134] sm:$0xf]
    %v106 = vld [vmem:[%s2 + $0x138] sm:$0xf]
    %v107 = vld [vmem:[%s2 + $0x13c] sm:$0xf]
    %v108 = vld [vmem:[%s2 + $0x140] sm:$0xf]
    %v109 = vld [vmem:[%s2 + $0x144] sm:$0xf]
    %v110 = vld [vmem:[%s2 + $0x148] sm:$0xf]
    %v111 = vld [vmem:[%s2 + $0x14c] sm:$0xf]
    %v112 = vld [vmem:[%s2 + $0x150] sm:$0xf]
    %v113 = vld [vmem:[%s2 + $0x154] sm:$0xf]
    %v114 = vld [vmem:[%s2 + $0x158] sm:$0xf]
    %v115 = vld [vmem:[%s2 + $0x15c] sm:$0xf]
    %v116 = vld [vmem:[%s2 + $0x160] sm:$0xf]
    %v117 = vld [vmem:[%s2 + $0x164] sm:$0xf]
    %v118 = vld [vmem:[%s2 + $0x168] sm:$0xf]
    %v119 = vld [vmem:[%s2 + $0x16c] sm:$0xf]
    %v120 = vld [vmem:[%s2 + $0x170] sm:$0xf]
    %v121 = vld [vmem:[%s2 + $0x174] sm:$0xf]
    %v122 = vld [vmem:[%s2 + $0x178] sm:$0xf]
    %v123 = vld [vmem:[%s2 + $0x17c] sm:$0xf]
    %v124 = vld [vmem:[%s2 + $0x180] sm:$0xf]
    %v125 = vld [vmem:[%s2 + $0x184] sm:$0xf]
    %v126 = vld [vmem:[%s2 + $0x188] sm:$0xf]
    %v127 = vld [vmem:[%s2 + $0x18c] sm:$0xf]
    %v128 = vld [vmem:[%s2 + $0x190] sm:$0xf]
    %v129 = vld [vmem:[%s2 + $0x194] sm:$0xf]
    %v130 = vld [vmem:[%s2 + $0x198] sm:$0xf]
    %v131 = vld [vmem:[%s2 + $0x19c] sm:$0xf]
    %v132 = vld [vmem:[%s2 + $0x1a0] sm:$0xf]
    %v133 = vld [vmem:[%s2 + $0x1a4] sm:$0xf]
    %v134 = vld [vmem:[%s2 + $0x1a8] sm:$0xf]
    %v135 = vld [vmem:[%s2 + $0x1ac] sm:$0xf]
    %v136 = vld [vmem:[%s2 + $0x1b0] sm:$0xf]
    %v137 = vld [vmem:[%s2 + $0x1b4] sm:$0xf]
    %v138 = vld [vmem:[%s2 + $0x1b8] sm:$0xf]
    %v139 = vld [vmem:[%s2 + $0x1bc] sm:$0xf]
    %v140 = vld [vmem:[%s2 + $0x1c0] sm:$0xf]
    %v141 = vld [vmem:[%s2 + $0x1c4] sm:$0xf]
    %v142 = vld [vmem:[%s2 + $0x1c8] sm:$0xf]
    %v143 = vld [vmem:[%s2 + $0x1cc] sm:$0xf]
    %v144 = vld [vmem:[%s2 + $0x1d0] sm:$0xf]
    %v145 = vld [vmem:[%s2 + $0x1d4] sm:$0xf]
    %v146 = vld [vmem:[%s2 + $0x1d8] sm:$0xf]
    %v147 = vld [vmem:[%s2 + $0x1dc] sm:$0xf]
    %v148 = vld [vmem:[%s2 + $0x1e0] sm:$0xf]
    %v149 = vld [vmem:[%s2 + $0x1e4] sm:$0xf]
    %v150 = vld [vmem:[%s2 + $0x1e8] sm:$0xf]
    %v151 = vld [vmem:[%s2 + $0x1ec] sm:$0xf]
    %v152 = vld [vmem:[%s2 + $0x1f0] sm:$0xf]
    %v153 = vld [vmem:[%s2 + $0x1f4] sm:$0xf]
    %v154 = vld [vmem:[%s2 + $0x1f8] sm:$0xf]
    %v155 = vld [vmem:[%s2 + $0x1fc] sm:$0xf]
    %v158 = vcombine.high %v26, %v26
    %v160 = vunpack.c.l.s4 1983009808
    %v161 = vunpack.c.0.s8 %v160
    %v162 = vlaneseq
    %v163 = vshrl.u32 %v162, 7
    %v164 = vsub.s32 %v161, %v163
    %v165 = vrot.slane %v26, %v164
    %v167 = vunpack.c.l.s4 1983009808
    %v168 = vunpack.c.0.s8 %v167
    %v169 = vlaneseq
    %v170 = vshrl.u32 %v169, 7
    %v171 = vsub.s32 %v168, %v170
    %v172 = vrot.slane %v158, %v171
    %v173 = vcombine.high %v165, %v165
    %v174 = vcombine.high %v172, %v172
    %v175 = vcombine.high %v27, %v27
    %v177 = vunpack.c.l.s4 1983009808
    %v178 = vunpack.c.0.s8 %v177
    %v179 = vlaneseq
    %v180 = vshrl.u32 %v179, 7
    %v181 = vsub.s32 %v178, %v180
    %v182 = vrot.slane %v27, %v181
    %v184 = vunpack.c.l.s4 1983009808
    %v185 = vunpack.c.0.s8 %v184
    %v186 = vlaneseq
    %v187 = vshrl.u32 %v186, 7
    %v188 = vsub.s32 %v185, %v187
    %v189 = vrot.slane %v175, %v188
    %v190 = vcombine.high %v182, %v182
    %v191 = vcombine.high %v189, %v189
    %v200 = vpack.c.bf16 %v165, %v165
    %v201 = vpack.c.bf16 %v173, %v173
    %v202 = vpack.c.bf16 %v172, %v172
    %v203 = vpack.c.bf16 %v174, %v174
    %v204 = vpack.c.bf16 %v182, %v182
    %v205 = vpack.c.bf16 %v190, %v190
    %v206 = vpack.c.bf16 %v189, %v189
    %v207 = vpack.c.bf16 %v191, %v191
    %v208 = vld [vmem:[%s5] sm:$0x1]
    %v209 = vlaneseq
    %v210 = vshrl.u32 %v209, 7
    %v211 = vsub.s32 0, %v210
    %v212 = vrot.slane %v208, %v211
    %v341 = vunpack.c.l.b16 %v28
    %v342 = vunpack.c.l.b16 %v29
    %v343 = vunpack.c.l.b16 %v30
    %v344 = vunpack.c.l.b16 %v31
    %v345 = vunpack.c.l.b16 %v32
    %v346 = vunpack.c.l.b16 %v33
    %v347 = vunpack.c.l.b16 %v34
    %v348 = vunpack.c.l.b16 %v35
    %v349 = vunpack.c.l.b16 %v36
    %v350 = vunpack.c.l.b16 %v37
    %v351 = vunpack.c.l.b16 %v38
    %v352 = vunpack.c.l.b16 %v39
    %v353 = vunpack.c.l.b16 %v40
    %v354 = vunpack.c.l.b16 %v41
    %v355 = vunpack.c.l.b16 %v42
    %v356 = vunpack.c.l.b16 %v43
    %v357 = vunpack.c.l.b16 %v44
    %v358 = vunpack.c.l.b16 %v45
    %v359 = vunpack.c.l.b16 %v46
    %v360 = vunpack.c.l.b16 %v47
    %v361 = vunpack.c.l.b16 %v48
    %v362 = vunpack.c.l.b16 %v49
    %v363 = vunpack.c.l.b16 %v50
    %v364 = vunpack.c.l.b16 %v51
    %v365 = vunpack.c.l.b16 %v52
    %v366 = vunpack.c.l.b16 %v53
    %v367 = vunpack.c.l.b16 %v54
    %v368 = vunpack.c.l.b16 %v55
    %v369 = vunpack.c.l.b16 %v56
    %v370 = vunpack.c.l.b16 %v57
    %v371 = vunpack.c.l.b16 %v58
    %v372 = vunpack.c.l.b16 %v59
    %v373 = vunpack.c.l.b16 %v60
    %v374 = vunpack.c.l.b16 %v61
    %v375 = vunpack.c.l.b16 %v62
    %v376 = vunpack.c.l.b16 %v63
    %v377 = vunpack.c.l.b16 %v64
    %v378 = vunpack.c.l.b16 %v65
    %v379 = vunpack.c.l.b16 %v66
    %v380 = vunpack.c.l.b16 %v67
    %v381 = vunpack.c.l.b16 %v68
    %v382 = vunpack.c.l.b16 %v69
    %v383 = vunpack.c.l.b16 %v70
    %v384 = vunpack.c.l.b16 %v71
    %v385 = vunpack.c.l.b16 %v72
    %v386 = vunpack.c.l.b16 %v73
    %v387 = vunpack.c.l.b16 %v74
    %v388 = vunpack.c.l.b16 %v75
    %v389 = vunpack.c.l.b16 %v76
    %v390 = vunpack.c.l.b16 %v77
    %v391 = vunpack.c.l.b16 %v78
    %v392 = vunpack.c.l.b16 %v79
    %v393 = vunpack.c.l.b16 %v80
    %v394 = vunpack.c.l.b16 %v81
    %v395 = vunpack.c.l.b16 %v82
    %v396 = vunpack.c.l.b16 %v83
    %v397 = vunpack.c.l.b16 %v84
    %v398 = vunpack.c.l.b16 %v85
    %v399 = vunpack.c.l.b16 %v86
    %v400 = vunpack.c.l.b16 %v87
    %v401 = vunpack.c.l.b16 %v88
    %v402 = vunpack.c.l.b16 %v89
    %v403 = vunpack.c.l.b16 %v90
    %v404 = vunpack.c.l.b16 %v91
    %v405 = vunpack.c.l.b16 %v92
    %v406 = vunpack.c.l.b16 %v93
    %v407 = vunpack.c.l.b16 %v94
    %v408 = vunpack.c.l.b16 %v95
    %v409 = vunpack.c.l.b16 %v96
    %v410 = vunpack.c.l.b16 %v97
    %v411 = vunpack.c.l.b16 %v98
    %v412 = vunpack.c.l.b16 %v99
    %v413 = vunpack.c.l.b16 %v100
    %v414 = vunpack.c.l.b16 %v101
    %v415 = vunpack.c.l.b16 %v102
    %v416 = vunpack.c.l.b16 %v103
    %v417 = vunpack.c.l.b16 %v104
    %v418 = vunpack.c.l.b16 %v105
    %v419 = vunpack.c.l.b16 %v106
    %v420 = vunpack.c.l.b16 %v107
    %v421 = vunpack.c.l.b16 %v108
    %v422 = vunpack.c.l.b16 %v109
    %v423 = vunpack.c.l.b16 %v110
    %v424 = vunpack.c.l.b16 %v111
    %v425 = vunpack.c.l.b16 %v112
    %v426 = vunpack.c.l.b16 %v113
    %v427 = vunpack.c.l.b16 %v114
    %v428 = vunpack.c.l.b16 %v115
    %v429 = vunpack.c.l.b16 %v116
    %v430 = vunpack.c.l.b16 %v117
    %v431 = vunpack.c.l.b16 %v118
    %v432 = vunpack.c.l.b16 %v119
    %v433 = vunpack.c.l.b16 %v120
    %v434 = vunpack.c.l.b16 %v121
    %v435 = vunpack.c.l.b16 %v122
    %v436 = vunpack.c.l.b16 %v123
    %v437 = vunpack.c.l.b16 %v124
    %v438 = vunpack.c.l.b16 %v125
    %v439 = vunpack.c.l.b16 %v126
    %v440 = vunpack.c.l.b16 %v127
    %v441 = vunpack.c.l.b16 %v128
    %v442 = vunpack.c.l.b16 %v129
    %v443 = vunpack.c.l.b16 %v130
    %v444 = vunpack.c.l.b16 %v131
    %v445 = vunpack.c.l.b16 %v132
    %v446 = vunpack.c.l.b16 %v133
    %v447 = vunpack.c.l.b16 %v134
    %v448 = vunpack.c.l.b16 %v135
    %v449 = vunpack.c.l.b16 %v136
    %v450 = vunpack.c.l.b16 %v137
    %v451 = vunpack.c.l.b16 %v138
    %v452 = vunpack.c.l.b16 %v139
    %v453 = vunpack.c.l.b16 %v140
    %v454 = vunpack.c.l.b16 %v141
    %v455 = vunpack.c.l.b16 %v142
    %v456 = vunpack.c.l.b16 %v143
    %v457 = vunpack.c.l.b16 %v144
    %v458 = vunpack.c.l.b16 %v145
    %v459 = vunpack.c.l.b16 %v146
    %v460 = vunpack.c.l.b16 %v147
    %v461 = vunpack.c.l.b16 %v148
    %v462 = vunpack.c.l.b16 %v149
    %v463 = vunpack.c.l.b16 %v150
    %v464 = vunpack.c.l.b16 %v151
    %v465 = vunpack.c.l.b16 %v152
    %v466 = vunpack.c.l.b16 %v153
    %v467 = vunpack.c.l.b16 %v154
    %v468 = vunpack.c.l.b16 %v155
    %v469 = vpack.c.b16 %v342, %v341
    %v470 = vpack.c.b16 %v344, %v343
    %v471 = vpack.c.b16 %v346, %v345
    %v472 = vpack.c.b16 %v348, %v347
    %v473 = vpack.c.b16 %v350, %v349
    %v474 = vpack.c.b16 %v352, %v351
    %v475 = vpack.c.b16 %v354, %v353
    %v476 = vpack.c.b16 %v356, %v355
    %v477 = vpack.c.b16 %v358, %v357
    %v478 = vpack.c.b16 %v360, %v359
    %v479 = vpack.c.b16 %v362, %v361
    %v480 = vpack.c.b16 %v364, %v363
    %v481 = vpack.c.b16 %v366, %v365
    %v482 = vpack.c.b16 %v368, %v367
    %v483 = vpack.c.b16 %v370, %v369
    %v484 = vpack.c.b16 %v372, %v371
    %v485 = vpack.c.b16 %v374, %v373
    %v486 = vpack.c.b16 %v376, %v375
    %v487 = vpack.c.b16 %v378, %v377
    %v488 = vpack.c.b16 %v380, %v379
    %v489 = vpack.c.b16 %v382, %v381
    %v490 = vpack.c.b16 %v384, %v383
    %v491 = vpack.c.b16 %v386, %v385
    %v492 = vpack.c.b16 %v388, %v387
    %v493 = vpack.c.b16 %v390, %v389
    %v494 = vpack.c.b16 %v392, %v391
    %v495 = vpack.c.b16 %v394, %v393
    %v496 = vpack.c.b16 %v396, %v395
    %v497 = vpack.c.b16 %v398, %v397
    %v498 = vpack.c.b16 %v400, %v399
    %v499 = vpack.c.b16 %v402, %v401
    %v500 = vpack.c.b16 %v404, %v403
    %v501 = vpack.c.b16 %v406, %v405
    %v502 = vpack.c.b16 %v408, %v407
    %v503 = vpack.c.b16 %v410, %v409
    %v504 = vpack.c.b16 %v412, %v411
    %v505 = vpack.c.b16 %v414, %v413
    %v506 = vpack.c.b16 %v416, %v415
    %v507 = vpack.c.b16 %v418, %v417
    %v508 = vpack.c.b16 %v420, %v419
    %v509 = vpack.c.b16 %v422, %v421
    %v510 = vpack.c.b16 %v424, %v423
    %v511 = vpack.c.b16 %v426, %v425
    %v512 = vpack.c.b16 %v428, %v427
    %v513 = vpack.c.b16 %v430, %v429
    %v514 = vpack.c.b16 %v432, %v431
    %v515 = vpack.c.b16 %v434, %v433
    %v516 = vpack.c.b16 %v436, %v435
    %v517 = vpack.c.b16 %v438, %v437
    %v518 = vpack.c.b16 %v440, %v439
    %v519 = vpack.c.b16 %v442, %v441
    %v520 = vpack.c.b16 %v444, %v443
    %v521 = vpack.c.b16 %v446, %v445
    %v522 = vpack.c.b16 %v448, %v447
    %v523 = vpack.c.b16 %v450, %v449
    %v524 = vpack.c.b16 %v452, %v451
    %v525 = vpack.c.b16 %v454, %v453
    %v526 = vpack.c.b16 %v456, %v455
    %v527 = vpack.c.b16 %v458, %v457
    %v528 = vpack.c.b16 %v460, %v459
    %v529 = vpack.c.b16 %v462, %v461
    %v530 = vpack.c.b16 %v464, %v463
    %v531 = vpack.c.b16 %v466, %v465
    %v532 = vpack.c.b16 %v468, %v467
    %597 = vmatprep.subr.bf16.mxu0 0
    %598 = vmatpush1.bf16.msra.mxu0 %v469
    %599 = vmatprep.subr.bf16.mxu0 0
    %600 = vmatpush1.bf16.msra.mxu0 %v470
    %601 = vmatprep.subr.bf16.mxu0 0
    %602 = vmatpush1.bf16.msra.mxu0 %v471
    %603 = vmatprep.subr.bf16.mxu0 0
    %604 = vmatpush1.bf16.msra.mxu0 %v472
    %605 = vmatprep.subr.bf16.mxu0 0
    %606 = vmatpush1.bf16.msra.mxu0 %v473
    %607 = vmatprep.subr.bf16.mxu0 0
    %608 = vmatpush1.bf16.msra.mxu0 %v474
    %609 = vmatprep.subr.bf16.mxu0 0
    %610 = vmatpush1.bf16.msra.mxu0 %v475
    %611 = vmatprep.subr.bf16.mxu0 0
    %612 = vmatpush1.bf16.msra.mxu0 %v476
    %613 = vmatprep.subr.bf16.mxu0 0
    %614 = vmatpush1.bf16.msra.mxu0 %v477
    %615 = vmatprep.subr.bf16.mxu0 0
    %616 = vmatpush1.bf16.msra.mxu0 %v478
    %617 = vmatprep.subr.bf16.mxu0 0
    %618 = vmatpush1.bf16.msra.mxu0 %v479
    %619 = vmatprep.subr.bf16.mxu0 0
    %620 = vmatpush1.bf16.msra.mxu0 %v480
    %621 = vmatprep.subr.bf16.mxu0 0
    %622 = vmatpush1.bf16.msra.mxu0 %v481
    %623 = vmatprep.subr.bf16.mxu0 0
    %624 = vmatpush1.bf16.msra.mxu0 %v482
    %625 = vmatprep.subr.bf16.mxu0 0
    %626 = vmatpush1.bf16.msra.mxu0 %v483
    %627 = vmatprep.subr.bf16.mxu0 0
    %628 = vmatpush1.bf16.msra.mxu0 %v484
    %629 = vmatprep.mubr.bf16.mxu0 %v201
    %630 = vmatmul.mubr.bf16.gmra.mrb[0].mxu0 %v200
    %v631 = vpop.f32.mrb[0].mxu0
    %v632 = vadd.f32 %v212, %v631
    %v633 = vpop.f32.mrb[0].mxu0
    %v634 = vpop.f32.mrb[0].mxu0
    %v635 = vpop.f32.mrb[0].mxu0
    %636 = vdwg.mxu0
    %637 = vmatprep.subr.bf16.mxu0 0
    %638 = vmatpush1.bf16.msra.mxu0 %v485
    %639 = vmatprep.subr.bf16.mxu0 0
    %640 = vmatpush1.bf16.msra.mxu0 %v486
    %641 = vmatprep.subr.bf16.mxu0 0
    %642 = vmatpush1.bf16.msra.mxu0 %v487
    %643 = vmatprep.subr.bf16.mxu0 0
    %644 = vmatpush1.bf16.msra.mxu0 %v488
    %645 = vmatprep.subr.bf16.mxu0 0
    %646 = vmatpush1.bf16.msra.mxu0 %v489
    %647 = vmatprep.subr.bf16.mxu0 0
    %648 = vmatpush1.bf16.msra.mxu0 %v490
    %649 = vmatprep.subr.bf16.mxu0 0
    %650 = vmatpush1.bf16.msra.mxu0 %v491
    %651 = vmatprep.subr.bf16.mxu0 0
    %652 = vmatpush1.bf16.msra.mxu0 %v492
    %653 = vmatprep.subr.bf16.mxu0 0
    %654 = vmatpush1.bf16.msra.mxu0 %v493
    %655 = vmatprep.subr.bf16.mxu0 0
    %656 = vmatpush1.bf16.msra.mxu0 %v494
    %657 = vmatprep.subr.bf16.mxu0 0
    %658 = vmatpush1.bf16.msra.mxu0 %v495
    %659 = vmatprep.subr.bf16.mxu0 0
    %660 = vmatpush1.bf16.msra.mxu0 %v496
    %661 = vmatprep.subr.bf16.mxu0 0
    %662 = vmatpush1.bf16.msra.mxu0 %v497
    %663 = vmatprep.subr.bf16.mxu0 0
    %664 = vmatpush1.bf16.msra.mxu0 %v498
    %665 = vmatprep.subr.bf16.mxu0 0
    %666 = vmatpush1.bf16.msra.mxu0 %v499
    %667 = vmatprep.subr.bf16.mxu0 0
    %668 = vmatpush1.bf16.msra.mxu0 %v500
    %669 = vmatprep.mubr.bf16.mxu0 %v203
    %670 = vmatmul.mubr.bf16.gmra.mrb[0].mxu0 %v202
    %v671 = vpop.f32.mrb[0].mxu0
    %v672 = vadd.f32 %v632, %v671
    %v673 = vpop.f32.mrb[0].mxu0
    %v674 = vpop.f32.mrb[0].mxu0
    %v675 = vpop.f32.mrb[0].mxu0
    %676 = vdwg.mxu0
    %677 = vmatprep.subr.bf16.mxu0 0
    %678 = vmatpush1.bf16.msra.mxu0 %v501
    %679 = vmatprep.subr.bf16.mxu0 0
    %680 = vmatpush1.bf16.msra.mxu0 %v502
    %681 = vmatprep.subr.bf16.mxu0 0
    %682 = vmatpush1.bf16.msra.mxu0 %v503
    %683 = vmatprep.subr.bf16.mxu0 0
    %684 = vmatpush1.bf16.msra.mxu0 %v504
    %685 = vmatprep.subr.bf16.mxu0 0
    %686 = vmatpush1.bf16.msra.mxu0 %v505
    %687 = vmatprep.subr.bf16.mxu0 0
    %688 = vmatpush1.bf16.msra.mxu0 %v506
    %689 = vmatprep.subr.bf16.mxu0 0
    %690 = vmatpush1.bf16.msra.mxu0 %v507
    %691 = vmatprep.subr.bf16.mxu0 0
    %692 = vmatpush1.bf16.msra.mxu0 %v508
    %693 = vmatprep.subr.bf16.mxu0 0
    %694 = vmatpush1.bf16.msra.mxu0 %v509
    %695 = vmatprep.subr.bf16.mxu0 0
    %696 = vmatpush1.bf16.msra.mxu0 %v510
    %697 = vmatprep.subr.bf16.mxu0 0
    %698 = vmatpush1.bf16.msra.mxu0 %v511
    %699 = vmatprep.subr.bf16.mxu0 0
    %700 = vmatpush1.bf16.msra.mxu0 %v512
    %701 = vmatprep.subr.bf16.mxu0 0
    %702 = vmatpush1.bf16.msra.mxu0 %v513
    %703 = vmatprep.subr.bf16.mxu0 0
    %704 = vmatpush1.bf16.msra.mxu0 %v514
    %705 = vmatprep.subr.bf16.mxu0 0
    %706 = vmatpush1.bf16.msra.mxu0 %v515
    %707 = vmatprep.subr.bf16.mxu0 0
    %708 = vmatpush1.bf16.msra.mxu0 %v516
    %709 = vmatprep.mubr.bf16.mxu0 %v205
    %710 = vmatmul.mubr.bf16.gmra.mrb[0].mxu0 %v204
    %v711 = vpop.f32.mrb[0].mxu0
    %v712 = vadd.f32 %v672, %v711
    %v713 = vpop.f32.mrb[0].mxu0
    %v714 = vpop.f32.mrb[0].mxu0
    %v715 = vpop.f32.mrb[0].mxu0
    %716 = vdwg.mxu0
    %717 = vmatprep.subr.bf16.mxu0 0
    %718 = vmatpush1.bf16.msra.mxu0 %v517
    %719 = vmatprep.subr.bf16.mxu0 0
    %720 = vmatpush1.bf16.msra.mxu0 %v518
    %721 = vmatprep.subr.bf16.mxu0 0
    %722 = vmatpush1.bf16.msra.mxu0 %v519
    %723 = vmatprep.subr.bf16.mxu0 0
    %724 = vmatpush1.bf16.msra.mxu0 %v520
    %725 = vmatprep.subr.bf16.mxu0 0
    %726 = vmatpush1.bf16.msra.mxu0 %v521
    %727 = vmatprep.subr.bf16.mxu0 0
    %728 = vmatpush1.bf16.msra.mxu0 %v522
    %729 = vmatprep.subr.bf16.mxu0 0
    %730 = vmatpush1.bf16.msra.mxu0 %v523
    %731 = vmatprep.subr.bf16.mxu0 0
    %732 = vmatpush1.bf16.msra.mxu0 %v524
    %733 = vmatprep.subr.bf16.mxu0 0
    %734 = vmatpush1.bf16.msra.mxu0 %v525
    %735 = vmatprep.subr.bf16.mxu0 0
    %736 = vmatpush1.bf16.msra.mxu0 %v526
    %737 = vmatprep.subr.bf16.mxu0 0
    %738 = vmatpush1.bf16.msra.mxu0 %v527
    %739 = vmatprep.subr.bf16.mxu0 0
    %740 = vmatpush1.bf16.msra.mxu0 %v528
    %741 = vmatprep.subr.bf16.mxu0 0
    %742 = vmatpush1.bf16.msra.mxu0 %v529
    %743 = vmatprep.subr.bf16.mxu0 0
    %744 = vmatpush1.bf16.msra.mxu0 %v530
    %745 = vmatprep.subr.bf16.mxu0 0
    %746 = vmatpush1.bf16.msra.mxu0 %v531
    %747 = vmatprep.subr.bf16.mxu0 0
    %748 = vmatpush1.bf16.msra.mxu0 %v532
    %749 = vmatprep.mubr.bf16.mxu0 %v207
    %750 = vmatmul.mubr.bf16.gmra.mrb[0].mxu0 %v206
    %v751 = vpop.f32.mrb[0].mxu0
    %v752 = vadd.f32 %v712, %v751
    %v753 = vpop.f32.mrb[0].mxu0
    %v754 = vpop.f32.mrb[0].mxu0
    %v755 = vpop.f32.mrb[0].mxu0
    %756 = vdwg.mxu0
    %v757 = vld [vmem:[%s3 + $0x10] sm:$0xf]
    %v758 = vld [vmem:[%s3 + $0x28] sm:$0xf]
    %v759 = vld [vmem:[%s3 + $0x40] sm:$0xf]
    %v760 = vld [vmem:[%s3 + $0x58] sm:$0xf]
    %v761 = vpack.c.bf16 %v25, %v25
    %v762 = vld [vmem:[%s5 + $0x1] sm:$0x1]
    %v763 = vlaneseq
    %v764 = vshrl.u32 %v763, 7
    %v765 = vsub.s32 0, %v764
    %v766 = vrot.slane %v762, %v765
    %v771 = vunpack.c.l.b16 %v757
    %v772 = vunpack.c.l.b16 %v758
    %v773 = vunpack.c.l.b16 %v759
    %v774 = vunpack.c.l.b16 %v760
    %v775 = vpack.c.b16 %v772, %v771
    %v776 = vpack.c.b16 %v774, %v773
    %777 = vrot.lane.b32.xlu0 %v775, 32
    %v778 = vpop.permute.xlu0 %777
    %779 = vrot.lane.b32.xlu0 %v776, 32
    %v780 = vpop.permute.xlu0 %779
    %vm783 = vcmask 261120
    %v785 = vsel %vm783, %v761, 0
    %787 = vmatprep.subr.bf16.mxu0 0
    %788 = vmatpush1.bf16.msra.mxu0 %v778
    %789 = vmatprep.subr.bf16.mxu0 0
    %790 = vmatpush1.bf16.msra.mxu0 %v780
    %791 = vmatprep.subr.bf16.mxu0 0
    %792 = vmatpush1.bf16.msra.mxu0 0
    %793 = vmatprep.subr.bf16.mxu0 0
    %794 = vmatpush1.bf16.msra.mxu0 0
    %795 = vmatprep.subr.bf16.mxu0 0
    %796 = vmatpush1.bf16.msra.mxu0 0
    %797 = vmatprep.subr.bf16.mxu0 0
    %798 = vmatpush1.bf16.msra.mxu0 0
    %799 = vmatprep.subr.bf16.mxu0 0
    %800 = vmatpush1.bf16.msra.mxu0 0
    %801 = vmatprep.subr.bf16.mxu0 0
    %802 = vmatpush1.bf16.msra.mxu0 0
    %803 = vmatprep.subr.bf16.mxu0 0
    %804 = vmatpush1.bf16.msra.mxu0 0
    %805 = vmatprep.subr.bf16.mxu0 0
    %806 = vmatpush1.bf16.msra.mxu0 0
    %807 = vmatprep.subr.bf16.mxu0 0
    %808 = vmatpush1.bf16.msra.mxu0 0
    %809 = vmatprep.subr.bf16.mxu0 0
    %810 = vmatpush1.bf16.msra.mxu0 0
    %811 = vmatprep.subr.bf16.mxu0 0
    %812 = vmatpush1.bf16.msra.mxu0 0
    %813 = vmatprep.subr.bf16.mxu0 0
    %814 = vmatpush1.bf16.msra.mxu0 0
    %815 = vmatprep.subr.bf16.mxu0 0
    %816 = vmatpush1.bf16.msra.mxu0 0
    %817 = vmatprep.subr.bf16.mxu0 0
    %818 = vmatpush1.bf16.msra.mxu0 0
    %819 = vmatprep.mubr.bf16.mxu0 0
    %820 = vmatmul.mubr.bf16.gmra.mrb[0].mxu0 %v785
    %v821 = vpop.f32.mrb[0].mxu0
    %v822 = vadd.f32 %v766, %v821
    %v823 = vpop.f32.mrb[0].mxu0
    %v824 = vpop.f32.mrb[0].mxu0
    %v825 = vpop.f32.mrb[0].mxu0
    %826 = vdwg.mxu0
    %v827 = vld [vmem:[%s3] sm:$0xf]
    %v828 = vld [vmem:[%s3 + $0x18] sm:$0xf]
    %v829 = vld [vmem:[%s3 + $0x30] sm:$0xf]
    %v830 = vld [vmem:[%s3 + $0x48] sm:$0xf]
    %v831 = vld [vmem:[%s5 + $0x2] sm:$0x1]
    %v832 = vlaneseq
    %v833 = vshrl.u32 %v832, 7
    %v834 = vsub.s32 0, %v833
    %v835 = vrot.slane %v831, %v834
    %837 = vrot.lane.b32.xlu0 %v761, 96
    %v838 = vpop.permute.xlu0 %837
    %v843 = vunpack.c.l.b16 %v827
    %v844 = vunpack.c.l.b16 %v828
    %v845 = vunpack.c.l.b16 %v829
    %v846 = vunpack.c.l.b16 %v830
    %v847 = vpack.c.b16 %v844, %v843
    %v848 = vpack.c.b16 %v846, %v845
    %v852 = vsel %vm783, %v838, 0
    %854 = vmatprep.subr.bf16.mxu0 0
    %855 = vmatpush1.bf16.msra.mxu0 %v847
    %856 = vmatprep.subr.bf16.mxu0 0
    %857 = vmatpush1.bf16.msra.mxu0 %v848
    %858 = vmatprep.subr.bf16.mxu0 0
    %859 = vmatpush1.bf16.msra.mxu0 0
    %860 = vmatprep.subr.bf16.mxu0 0
    %861 = vmatpush1.bf16.msra.mxu0 0
    %862 = vmatprep.subr.bf16.mxu0 0
    %863 = vmatpush1.bf16.msra.mxu0 0
    %864 = vmatprep.subr.bf16.mxu0 0
    %865 = vmatpush1.bf16.msra.mxu0 0
    %866 = vmatprep.subr.bf16.mxu0 0
    %867 = vmatpush1.bf16.msra.mxu0 0
    %868 = vmatprep.subr.bf16.mxu0 0
    %869 = vmatpush1.bf16.msra.mxu0 0
    %870 = vmatprep.subr.bf16.mxu0 0
    %871 = vmatpush1.bf16.msra.mxu0 0
    %872 = vmatprep.subr.bf16.mxu0 0
    %873 = vmatpush1.bf16.msra.mxu0 0
    %874 = vmatprep.subr.bf16.mxu0 0
    %875 = vmatpush1.bf16.msra.mxu0 0
    %876 = vmatprep.subr.bf16.mxu0 0
    %877 = vmatpush1.bf16.msra.mxu0 0
    %878 = vmatprep.subr.bf16.mxu0 0
    %879 = vmatpush1.bf16.msra.mxu0 0
    %880 = vmatprep.subr.bf16.mxu0 0
    %881 = vmatpush1.bf16.msra.mxu0 0
    %882 = vmatprep.subr.bf16.mxu0 0
    %883 = vmatpush1.bf16.msra.mxu0 0
    %884 = vmatprep.subr.bf16.mxu0 0
    %885 = vmatpush1.bf16.msra.mxu0 0
    %886 = vmatprep.mubr.bf16.mxu0 0
    %887 = vmatmul.mubr.bf16.gmra.mrb[0].mxu0 %v852
    %v888 = vpop.f32.mrb[0].mxu0
    %v889 = vadd.f32 %v835, %v888
    %v890 = vpop.f32.mrb[0].mxu0
    %v891 = vpop.f32.mrb[0].mxu0
    %v892 = vpop.f32.mrb[0].mxu0
    %893 = vdwg.mxu0
    %v894 = vxor.u32 %v889, 2147483648
    %v895 = vmul.f32 %v894, 1.442695
    %v896 = vpow.pop %v895
    %v897 = vadd.f32 %v896, 1.0
    %v898 = vrcp.pop %v897
    %v899 = vmul.f32 1.0, %v898
    %v900 = vmul.f32 %v889, %v899
    %v901 = vld [vmem:[%s4] sm:$0xf]
    %v902 = vld [vmem:[%s4 + $0x4] sm:$0xf]
    %v903 = vld [vmem:[%s4 + $0x8] sm:$0xf]
    %v904 = vld [vmem:[%s4 + $0xc] sm:$0xf]
    %v905 = vld [vmem:[%s4 + $0x10] sm:$0xf]
    %v906 = vld [vmem:[%s4 + $0x14] sm:$0xf]
    %v907 = vld [vmem:[%s4 + $0x18] sm:$0xf]
    %v908 = vld [vmem:[%s4 + $0x1c] sm:$0xf]
    %v909 = vld [vmem:[%s4 + $0x20] sm:$0xf]
    %v910 = vld [vmem:[%s4 + $0x24] sm:$0xf]
    %v911 = vld [vmem:[%s4 + $0x28] sm:$0xf]
    %v912 = vld [vmem:[%s4 + $0x2c] sm:$0xf]
    %v913 = vld [vmem:[%s4 + $0x30] sm:$0xf]
    %v914 = vld [vmem:[%s4 + $0x34] sm:$0xf]
    %v915 = vld [vmem:[%s4 + $0x38] sm:$0xf]
    %v916 = vld [vmem:[%s4 + $0x3c] sm:$0xf]
    %v917 = vpack.c.bf16 %v900, %v900
    %v918 = vld [vmem:[%s5 + $0x3] sm:$0x1]
    %v919 = vlaneseq
    %v920 = vshrl.u32 %v919, 7
    %v921 = vsub.s32 0, %v920
    %v922 = vrot.slane %v918, %v921
    %v939 = vunpack.c.l.b16 %v901
    %v940 = vunpack.c.l.b16 %v902
    %v941 = vunpack.c.l.b16 %v903
    %v942 = vunpack.c.l.b16 %v904
    %v943 = vunpack.c.l.b16 %v905
    %v944 = vunpack.c.l.b16 %v906
    %v945 = vunpack.c.l.b16 %v907
    %v946 = vunpack.c.l.b16 %v908
    %v947 = vunpack.c.l.b16 %v909
    %v948 = vunpack.c.l.b16 %v910
    %v949 = vunpack.c.l.b16 %v911
    %v950 = vunpack.c.l.b16 %v912
    %v951 = vunpack.c.l.b16 %v913
    %v952 = vunpack.c.l.b16 %v914
    %v953 = vunpack.c.l.b16 %v915
    %v954 = vunpack.c.l.b16 %v916
    %v955 = vpack.c.b16 %v940, %v939
    %v956 = vpack.c.b16 %v942, %v941
    %v957 = vpack.c.b16 %v944, %v943
    %v958 = vpack.c.b16 %v946, %v945
    %v959 = vpack.c.b16 %v948, %v947
    %v960 = vpack.c.b16 %v950, %v949
    %v961 = vpack.c.b16 %v952, %v951
    %v962 = vpack.c.b16 %v954, %v953
    %971 = vmatprep.subr.bf16.mxu0 0
    %972 = vmatpush1.bf16.msra.mxu0 %v955
    %973 = vmatprep.subr.bf16.mxu0 0
    %974 = vmatpush1.bf16.msra.mxu0 %v956
    %975 = vmatprep.subr.bf16.mxu0 0
    %976 = vmatpush1.bf16.msra.mxu0 %v957
    %977 = vmatprep.subr.bf16.mxu0 0
    %978 = vmatpush1.bf16.msra.mxu0 %v958
    %979 = vmatprep.subr.bf16.mxu0 0
    %980 = vmatpush1.bf16.msra.mxu0 %v959
    %981 = vmatprep.subr.bf16.mxu0 0
    %982 = vmatpush1.bf16.msra.mxu0 %v960
    %983 = vmatprep.subr.bf16.mxu0 0
    %984 = vmatpush1.bf16.msra.mxu0 %v961
    %985 = vmatprep.subr.bf16.mxu0 0
    %986 = vmatpush1.bf16.msra.mxu0 %v962
    %987 = vmatprep.subr.bf16.mxu0 0
    %988 = vmatpush1.bf16.msra.mxu0 0
    %989 = vmatprep.subr.bf16.mxu0 0
    %990 = vmatpush1.bf16.msra.mxu0 0
    %991 = vmatprep.subr.bf16.mxu0 0
    %992 = vmatpush1.bf16.msra.mxu0 0
    %993 = vmatprep.subr.bf16.mxu0 0
    %994 = vmatpush1.bf16.msra.mxu0 0
    %995 = vmatprep.subr.bf16.mxu0 0
    %996 = vmatpush1.bf16.msra.mxu0 0
    %997 = vmatprep.subr.bf16.mxu0 0
    %998 = vmatpush1.bf16.msra.mxu0 0
    %999 = vmatprep.subr.bf16.mxu0 0
    %1000 = vmatpush1.bf16.msra.mxu0 0
    %1001 = vmatprep.subr.bf16.mxu0 0
    %1002 = vmatpush1.bf16.msra.mxu0 0
    %1003 = vmatprep.mubr.bf16.mxu0 0
    %1004 = vmatmul.mubr.bf16.gmra.mrb[0].mxu0 %v917
    %v1005 = vpop.f32.mrb[0].mxu0
    %v1006 = vadd.f32 %v922, %v1005
    %v1007 = vpop.f32.mrb[0].mxu0
    %v1008 = vpop.f32.mrb[0].mxu0
    %v1009 = vpop.f32.mrb[0].mxu0
    %1010 = vdwg.mxu0
    %1012 = vset.pattern.permute.xlu0 96
    %1013 = vperm.xlu0 %1012, %v25
    %v1014 = vpop.permute.xlu0 %1013
    %v1016 = vmul.f32 %v1014, %v752
    %1017 = vset.pattern.permute.xlu0 97
    %1018 = vperm.xlu0 %1017, %v25
    %v1019 = vpop.permute.xlu0 %1018
    %v1021 = vmul.f32 %v1019, %v25
    %1023 = vrot.lane.b32.xlu0 %v1021, 64
    %v1024 = vpop.permute.xlu0 %1023
    %v1026 = vadd.f32 %v1016, %v1024
    %v1027 = vld [vmem:[%s5 + $0x4] sm:$0x1]
    %v1028 = vlaneseq
    %v1029 = vshrl.u32 %v1028, 7
    %v1030 = vsub.s32 0, %v1029
    %v1031 = vrot.slane %v1027, %v1030
    %v1033 = vrot.slane %v822, 6
    %v1036 = vrot.slane %v1006, 4
    %v1039 = vrot.slane %v1026, 2
    %vm1041 = vcmask 1041408
    %v1042 = vsel %vm1041, %v25, %v1033
    %vm1043 = vcmask 1043456
    %v1044 = vsel %vm1043, %v1042, %v1036
    %vm1045 = vcmask 1045504
    %v1046 = vsel %vm1045, %v1044, %v1039
    %v1047 = vlaneseq
    %v1048 = vand.u32 %v1047, 127
    %vm1049 = vcmp.ge.s32.totalorder %v1048, 0
    %vm1050 = vcmp.lt.s32.totalorder %v1048, 8
    %vm1051 = vmand %vm1049, %vm1050
    %v1052 = vsel %vm1051, 1.0, 0.0
    %vm1053 = vcmp.ge.s32.totalorder %v1048, 8
    %vm1054 = vcmp.lt.s32.totalorder %v1048, 16
    %vm1055 = vmand %vm1053, %vm1054
    %v1056 = vsel %vm1055, 1.0, 0.0
    %vm1057 = vcmp.ge.s32.totalorder %v1048, 16
    %vm1058 = vcmp.lt.s32.totalorder %v1048, 24
    %vm1059 = vmand %vm1057, %vm1058
    %v1060 = vsel %vm1059, 1.0, 0.0
    %vm1061 = vcmp.ge.s32.totalorder %v1048, 24
    %vm1062 = vcmp.lt.s32.totalorder %v1048, 32
    %vm1063 = vmand %vm1061, %vm1062
    %v1064 = vsel %vm1063, 1.0, 0.0
    %v1065 = vsel %vm1041, %v1052, %v1056
    %v1066 = vsel %vm1043, %v1056, %v1060
    %v1067 = vsel %vm1045, %v1060, %v1064
    %v1068 = vlaneseq
    %v1069 = vshrl.u32 %v1068, 7
    %v1070 = vadd.s32 %v1069, 8
    %vm1071 = vcmp.ge.s32.totalorder %v1048, 10
    %v1072 = vsel %vm1071, 1, 0
    %vm1073 = vcmp.ge.s32.totalorder %v1048, 20
    %v1074 = vsel %vm1073, 1, 0
    %v1075 = vadd.s32 %v1072, %v1074
    %vm1076 = vcmp.ge.s32.totalorder %v1048, 30
    %v1077 = vsel %vm1076, 1, 0
    %v1078 = vadd.s32 %v1075, %v1077
    %v1079 = vmul.u32 %v1078, 10
    %v1080 = vsub.s32 %v1048, %v1079
    %v1081 = vxor.u32 %v1069, %v1080
    %v1082 = vxor.u32 %v1070, %v1080
    %v1083 = vand.u32 %v1081, 1
    %v1084 = vand.u32 %v1082, 1
    %vm1085 = vcmp.eq.s32.totalorder %v1083, 0
    %vm1086 = vcmp.eq.s32.totalorder %v1084, 0
    %vm1087 = vcmp.le.s32.totalorder %v1080, %v1069
    %vm1088 = vcmp.le.s32.totalorder %v1080, %v1070
    %vm1089 = vmand %vm1085, %vm1087
    %vm1090 = vmand %vm1086, %vm1088
    %v1091 = vsel %vm1089, 0.0, -1e+30
    %v1092 = vsel %vm1090, 0.0, -1e+30
    %v1093 = vld [vmem:[%s5 + $0x8] sm:$0x1]
    %v1094 = vld [vmem:[%s5 + $0x9] sm:$0x1]
    %v1095 = vsel %vm783, %v1046, 0.0
    %1096 = vadd.xlane.f32.xlu0 %v1095
    %v1097 = vpop.xlane.xlu0 %1096
    %vm1098 = vcmask 254976
    %v1099 = vsel %vm1098, %v1031, 0.0
    %1100 = vadd.xlane.f32.xlu0 %v1099
    %v1101 = vpop.xlane.xlu0 %1100
    %v1102 = vrcp.pop 32.0
    %v1103 = vmul.f32 %v1097, %v1102
    %v1104 = vmul.f32 %v1101, %v1102
    %v1105 = vsub.f32 %v1046, %v1103
    %v1106 = vsub.f32 %v1031, %v1104
    %v1107 = vmul.f32 %v1105, %v1105
    %v1108 = vmul.f32 %v1106, %v1106
    %v1109 = vsel %vm783, %v1107, 0.0
    %1110 = vadd.xlane.f32.xlu0 %v1109
    %v1111 = vpop.xlane.xlu0 %1110
    %v1112 = vsel %vm1098, %v1108, 0.0
    %1113 = vadd.xlane.f32.xlu0 %v1112
    %v1114 = vpop.xlane.xlu0 %1113
    %v1115 = vmul.f32 %v1111, %v1102
    %v1116 = vmul.f32 %v1114, %v1102
    %v1117 = vadd.f32 %v1115, 1e-05
    %v1118 = vadd.f32 %v1116, 1e-05
    %v1119 = vrsqrt.pop %v1117
    %v1120 = vrsqrt.pop %v1118
    %v1121 = vmul.f32 %v1105, %v1119
    %v1122 = vmul.f32 %v1106, %v1120
    %v1123 = vlaneseq
    %v1124 = vshrl.u32 %v1123, 7
    %v1125 = vsub.s32 0, %v1124
    %v1126 = vrot.slane %v1093, %v1125
    %v1127 = vmul.f32 %v1121, %v1126
    %v1128 = vmul.f32 %v1122, %v1126
    %v1129 = vlaneseq
    %v1130 = vshrl.u32 %v1129, 7
    %v1131 = vsub.s32 0, %v1130
    %v1132 = vrot.slane %v1094, %v1131
    %v1133 = vadd.f32 %v1127, %v1132
    %v1134 = vadd.f32 %v1128, %v1132
    %v1135 = vld [vmem:[%s3 + $0xc] sm:$0xf]
    %v1136 = vld [vmem:[%s3 + $0x24] sm:$0xf]
    %v1137 = vld [vmem:[%s3 + $0x3c] sm:$0xf]
    %v1138 = vld [vmem:[%s3 + $0x54] sm:$0xf]
    %v1139 = vpack.c.bf16 %v1134, %v1133
    %v1140 = vld [vmem:[%s5 + $0xa] sm:$0x1]
    %v1141 = vlaneseq
    %v1142 = vshrl.u32 %v1141, 7
    %v1143 = vsub.s32 0, %v1142
    %v1144 = vrot.slane %v1140, %v1143
    %v1149 = vunpack.c.l.b16 %v1135
    %v1150 = vunpack.c.l.b16 %v1136
    %v1151 = vunpack.c.l.b16 %v1137
    %v1152 = vunpack.c.l.b16 %v1138
    %v1153 = vpack.c.b16 %v1150, %v1149
    %v1154 = vpack.c.b16 %v1152, %v1151
    %v1158 = vsel %vm783, %v1139, 0
    %1160 = vmatprep.subr.bf16.mxu0 0
    %1161 = vmatpush1.bf16.msra.mxu0 %v1153
    %1162 = vmatprep.subr.bf16.mxu0 0
    %1163 = vmatpush1.bf16.msra.mxu0 %v1154
    %1164 = vmatprep.subr.bf16.mxu0 0
    %1165 = vmatpush1.bf16.msra.mxu0 0
    %1166 = vmatprep.subr.bf16.mxu0 0
    %1167 = vmatpush1.bf16.msra.mxu0 0
    %1168 = vmatprep.subr.bf16.mxu0 0
    %1169 = vmatpush1.bf16.msra.mxu0 0
    %1170 = vmatprep.subr.bf16.mxu0 0
    %1171 = vmatpush1.bf16.msra.mxu0 0
    %1172 = vmatprep.subr.bf16.mxu0 0
    %1173 = vmatpush1.bf16.msra.mxu0 0
    %1174 = vmatprep.subr.bf16.mxu0 0
    %1175 = vmatpush1.bf16.msra.mxu0 0
    %1176 = vmatprep.subr.bf16.mxu0 0
    %1177 = vmatpush1.bf16.msra.mxu0 0
    %1178 = vmatprep.subr.bf16.mxu0 0
    %1179 = vmatpush1.bf16.msra.mxu0 0
    %1180 = vmatprep.subr.bf16.mxu0 0
    %1181 = vmatpush1.bf16.msra.mxu0 0
    %1182 = vmatprep.subr.bf16.mxu0 0
    %1183 = vmatpush1.bf16.msra.mxu0 0
    %1184 = vmatprep.subr.bf16.mxu0 0
    %1185 = vmatpush1.bf16.msra.mxu0 0
    %1186 = vmatprep.subr.bf16.mxu0 0
    %1187 = vmatpush1.bf16.msra.mxu0 0
    %1188 = vmatprep.subr.bf16.mxu0 0
    %1189 = vmatpush1.bf16.msra.mxu0 0
    %1190 = vmatprep.subr.bf16.mxu0 0
    %1191 = vmatpush1.bf16.msra.mxu0 0
    %1192 = vmatprep.mubr.bf16.mxu0 0
    %1193 = vmatmul.mubr.bf16.gmra.mrb[0].mxu0 %v1158
    %v1194 = vpop.f32.mrb[0].mxu0
    %v1195 = vadd.f32 %v1144, %v1194
    %v1196 = vpop.f32.mrb[0].mxu0
    %v1197 = vpop.f32.mrb[0].mxu0
    %v1198 = vadd.f32 %v1144, %v1197
    %v1199 = vpop.f32.mrb[0].mxu0
    %1200 = vdwg.mxu0
    %v1201 = vmul.f32 %v1195, 0.35355338
    %v1202 = vmul.f32 %v1198, 0.35355338
    %1204 = vrot.lane.b32.xlu0 %v1052, 32
    %v1205 = vpop.permute.xlu0 %1204
    %v1207 = vmul.f32 %v1195, %v1205
    %v1208 = vmul.f32 %v1198, %v1205
    %1210 = vrot.lane.b32.xlu0 %v1056, 32
    %v1211 = vpop.permute.xlu0 %1210
    %v1213 = vmul.f32 %v1195, %v1211
    %v1214 = vmul.f32 %v1198, %v1211
    %1216 = vrot.lane.b32.xlu0 %v1060, 32
    %v1217 = vpop.permute.xlu0 %1216
    %v1219 = vmul.f32 %v1195, %v1217
    %v1220 = vmul.f32 %v1198, %v1217
    %1222 = vrot.lane.b32.xlu0 %v1064, 32
    %v1223 = vpop.permute.xlu0 %1222
    %v1225 = vmul.f32 %v1195, %v1223
    %v1226 = vmul.f32 %v1198, %v1223
    %v1229 = vrot.slane %v1213, 6
    %v1230 = vrot.slane %v1214, 6
    %v1231 = vsel %vm1041, %v1229, %v1230
    %v1236 = vrot.slane %v1219, 4
    %v1237 = vrot.slane %v1220, 4
    %v1238 = vsel %vm1043, %v1236, %v1237
    %v1243 = vrot.slane %v1225, 2
    %v1244 = vrot.slane %v1226, 2
    %v1245 = vsel %vm1045, %v1243, %v1244
    %v1248 = vsel %vm1041, %v1208, %v1229
    %v1249 = vsel %vm1043, %v1231, %v1236
    %v1250 = vsel %vm1045, %v1238, %v1243
    %1251 = vrot.lane.b32.xlu0 %v1052, 64
    %v1252 = vpop.permute.xlu0 %1251
    %v1254 = vmul.f32 %v1195, %v1252
    %v1255 = vmul.f32 %v1198, %v1252
    %1256 = vrot.lane.b32.xlu0 %v1056, 64
    %v1257 = vpop.permute.xlu0 %1256
    %v1259 = vmul.f32 %v1195, %v1257
    %v1260 = vmul.f32 %v1198, %v1257
    %1261 = vrot.lane.b32.xlu0 %v1060, 64
    %v1262 = vpop.permute.xlu0 %1261
    %v1264 = vmul.f32 %v1195, %v1262
    %v1265 = vmul.f32 %v1198, %v1262
    %1266 = vrot.lane.b32.xlu0 %v1064, 64
    %v1267 = vpop.permute.xlu0 %1266
    %v1269 = vmul.f32 %v1195, %v1267
    %v1270 = vmul.f32 %v1198, %v1267
    %v1273 = vrot.slane %v1259, 6
    %v1274 = vrot.slane %v1260, 6
    %v1275 = vsel %vm1041, %v1273, %v1274
    %v1280 = vrot.slane %v1264, 4
    %v1281 = vrot.slane %v1265, 4
    %v1282 = vsel %vm1043, %v1280, %v1281
    %v1287 = vrot.slane %v1269, 2
    %v1288 = vrot.slane %v1270, 2
    %v1289 = vsel %vm1045, %v1287, %v1288
    %v1292 = vsel %vm1041, %v1255, %v1273
    %v1293 = vsel %vm1043, %v1275, %v1280
    %v1294 = vsel %vm1045, %v1282, %v1287
    %v1295 = vpack.c.bf16 %v1202, %v1201
    %v1296 = vpack.c.bf16 %v1248, %v1207
    %v1297 = vpack.c.bf16 %v1250, %v1249
    %v1298 = vpack.c.bf16 %v1245, %v1245
    %1302 = vrot.lane.b32.xlu0 %v1296, 96
    %v1303 = vpop.permute.xlu0 %1302
    %1304 = vrot.lane.b32.xlu0 %v1297, 96
    %v1305 = vpop.permute.xlu0 %1304
    %1306 = vrot.lane.b32.xlu0 %v1298, 96
    %v1307 = vpop.permute.xlu0 %1306
    %v1309 = vsel %vm783, %v1295, 0
    %v1312 = vsel %vm783, %v1303, 0
    %v1315 = vsel %vm783, %v1305, 0
    %v1318 = vsel %vm783, %v1307, 0
    %1320 = vmatprep.subr.bf16.mxu0 0
    %1321 = vmatpush1.bf16.xpose.msra.mxu0 %v1312
    %1322 = vmatprep.subr.bf16.mxu0 0
    %1323 = vmatpush1.bf16.xpose.msra.mxu0 %v1315
    %1324 = vmatprep.subr.bf16.mxu0 0
    %1325 = vmatpush1.bf16.xpose.msra.mxu0 %v1318
    %1326 = vmatprep.subr.bf16.mxu0 0
    %1327 = vmatpush1.bf16.xpose.msra.mxu0 0
    %1328 = vmatprep.subr.bf16.mxu0 0
    %1329 = vmatpush1.bf16.xpose.msra.mxu0 0
    %1330 = vmatprep.subr.bf16.mxu0 0
    %1331 = vmatpush1.bf16.xpose.msra.mxu0 0
    %1332 = vmatprep.subr.bf16.mxu0 0
    %1333 = vmatpush1.bf16.xpose.msra.mxu0 0
    %1334 = vmatprep.subr.bf16.mxu0 0
    %1335 = vmatpush1.bf16.xpose.msra.mxu0 0
    %1336 = vmatprep.subr.bf16.mxu0 0
    %1337 = vmatpush1.bf16.xpose.msra.mxu0 0
    %1338 = vmatprep.subr.bf16.mxu0 0
    %1339 = vmatpush1.bf16.xpose.msra.mxu0 0
    %1340 = vmatprep.subr.bf16.mxu0 0
    %1341 = vmatpush1.bf16.xpose.msra.mxu0 0
    %1342 = vmatprep.subr.bf16.mxu0 0
    %1343 = vmatpush1.bf16.xpose.msra.mxu0 0
    %1344 = vmatprep.subr.bf16.mxu0 0
    %1345 = vmatpush1.bf16.xpose.msra.mxu0 0
    %1346 = vmatprep.subr.bf16.mxu0 0
    %1347 = vmatpush1.bf16.xpose.msra.mxu0 0
    %1348 = vmatprep.subr.bf16.mxu0 0
    %1349 = vmatpush1.bf16.xpose.msra.mxu0 0
    %1350 = vmatprep.subr.bf16.mxu0 0
    %1351 = vmatpush1.bf16.xpose.msra.mxu0 0
    %1352 = vmatprep.mubr.bf16.mxu0 0
    %1353 = vmatmul.mubr.bf16.gmra.mrb[0].mxu0 %v1309
    %v1354 = vpop.f32.mrb[0].mxu0
    %v1355 = vadd.f32 %v1091, %v1354
    %v1356 = vpop.f32.mrb[0].mxu0
    %v1357 = vpop.f32.mrb[0].mxu0
    %v1358 = vadd.f32 %v1092, %v1357
    %v1359 = vpop.f32.mrb[0].mxu0
    %1360 = vdwg.mxu0
    %vm1361 = vcmask 326656
    %v1362 = vsel %vm1361, %v1355, -inf
    %1363 = vmax.xlane.f32.xlu0 %v1362
    %v1364 = vpop.xlane.xlu0 %1363
    %vm1365 = vcmask 320512
    %v1366 = vsel %vm1365, %v1358, -inf
    %1367 = vmax.xlane.f32.xlu0 %v1366
    %v1368 = vpop.xlane.xlu0 %1367
    %v1369 = vsub.f32 %v1355, %v1364
    %v1370 = vsub.f32 %v1358, %v1368
    %v1371 = vmul.f32 %v1369, 1.442695
    %v1372 = vpow.pop %v1371
    %v1373 = vmul.f32 %v1370, 1.442695
    %v1374 = vpow.pop %v1373
    %v1375 = vpack.c.bf16 %v1374, %v1372
    %v1376 = vpack.c.bf16 %v1292, %v1254
    %v1377 = vpack.c.bf16 %v1294, %v1293
    %v1378 = vpack.c.bf16 %v1289, %v1289
    %1382 = vrot.lane.b32.xlu0 %v1376, 64
    %v1383 = vpop.permute.xlu0 %1382
    %1384 = vrot.lane.b32.xlu0 %v1377, 64
    %v1385 = vpop.permute.xlu0 %1384
    %1386 = vrot.lane.b32.xlu0 %v1378, 64
    %v1387 = vpop.permute.xlu0 %1386
    %v1391 = vsel %vm1361, %v1375, 0
    %v1394 = vsel %vm1043, %v1387, 0
    %1396 = vmatprep.subr.bf16.mxu0 0
    %1397 = vmatpush1.bf16.msra.mxu0 %v1383
    %1398 = vmatprep.subr.bf16.mxu0 0
    %1399 = vmatpush1.bf16.msra.mxu0 %v1385
    %1400 = vmatprep.subr.bf16.mxu0 0
    %1401 = vmatpush1.bf16.msra.mxu0 %v1394
    %1402 = vmatprep.subr.bf16.mxu0 0
    %1403 = vmatpush1.bf16.msra.mxu0 0
    %1404 = vmatprep.subr.bf16.mxu0 0
    %1405 = vmatpush1.bf16.msra.mxu0 0
    %1406 = vmatprep.subr.bf16.mxu0 0
    %1407 = vmatpush1.bf16.msra.mxu0 0
    %1408 = vmatprep.subr.bf16.mxu0 0
    %1409 = vmatpush1.bf16.msra.mxu0 0
    %1410 = vmatprep.subr.bf16.mxu0 0
    %1411 = vmatpush1.bf16.msra.mxu0 0
    %1412 = vmatprep.subr.bf16.mxu0 0
    %1413 = vmatpush1.bf16.msra.mxu0 0
    %1414 = vmatprep.subr.bf16.mxu0 0
    %1415 = vmatpush1.bf16.msra.mxu0 0
    %1416 = vmatprep.subr.bf16.mxu0 0
    %1417 = vmatpush1.bf16.msra.mxu0 0
    %1418 = vmatprep.subr.bf16.mxu0 0
    %1419 = vmatpush1.bf16.msra.mxu0 0
    %1420 = vmatprep.subr.bf16.mxu0 0
    %1421 = vmatpush1.bf16.msra.mxu0 0
    %1422 = vmatprep.subr.bf16.mxu0 0
    %1423 = vmatpush1.bf16.msra.mxu0 0
    %1424 = vmatprep.subr.bf16.mxu0 0
    %1425 = vmatpush1.bf16.msra.mxu0 0
    %1426 = vmatprep.subr.bf16.mxu0 0
    %1427 = vmatpush1.bf16.msra.mxu0 0
    %1428 = vmatprep.mubr.bf16.mxu0 0
    %1429 = vmatmul.mubr.bf16.gmra.mrb[0].mxu0 %v1391
    %v1430 = vpop.f32.mrb[0].mxu0
    %v1431 = vadd.f32 0.0, %v1430
    %v1432 = vpop.f32.mrb[0].mxu0
    %v1433 = vpop.f32.mrb[0].mxu0
    %v1434 = vadd.f32 0.0, %v1433
    %v1435 = vpop.f32.mrb[0].mxu0
    %1436 = vdwg.mxu0
    %v1437 = vpack.c.bf16 %v1065, %v1052
    %v1438 = vpack.c.bf16 %v1067, %v1066
    %v1439 = vpack.c.bf16 %v1064, %v1064
    %v1441 = vsel %vm1043, %v1439, 0
    %1443 = vmatprep.subr.bf16.mxu0 0
    %1444 = vmatpush1.bf16.msra.mxu0 %v1437
    %1445 = vmatprep.subr.bf16.mxu0 0
    %1446 = vmatpush1.bf16.msra.mxu0 %v1438
    %1447 = vmatprep.subr.bf16.mxu0 0
    %1448 = vmatpush1.bf16.msra.mxu0 %v1441
    %1449 = vmatprep.subr.bf16.mxu0 0
    %1450 = vmatpush1.bf16.msra.mxu0 0
    %1451 = vmatprep.subr.bf16.mxu0 0
    %1452 = vmatpush1.bf16.msra.mxu0 0
    %1453 = vmatprep.subr.bf16.mxu0 0
    %1454 = vmatpush1.bf16.msra.mxu0 0
    %1455 = vmatprep.subr.bf16.mxu0 0
    %1456 = vmatpush1.bf16.msra.mxu0 0
    %1457 = vmatprep.subr.bf16.mxu0 0
    %1458 = vmatpush1.bf16.msra.mxu0 0
    %1459 = vmatprep.subr.bf16.mxu0 0
    %1460 = vmatpush1.bf16.msra.mxu0 0
    %1461 = vmatprep.subr.bf16.mxu0 0
    %1462 = vmatpush1.bf16.msra.mxu0 0
    %1463 = vmatprep.subr.bf16.mxu0 0
    %1464 = vmatpush1.bf16.msra.mxu0 0
    %1465 = vmatprep.subr.bf16.mxu0 0
    %1466 = vmatpush1.bf16.msra.mxu0 0
    %1467 = vmatprep.subr.bf16.mxu0 0
    %1468 = vmatpush1.bf16.msra.mxu0 0
    %1469 = vmatprep.subr.bf16.mxu0 0
    %1470 = vmatpush1.bf16.msra.mxu0 0
    %1471 = vmatprep.subr.bf16.mxu0 0
    %1472 = vmatpush1.bf16.msra.mxu0 0
    %1473 = vmatprep.subr.bf16.mxu0 0
    %1474 = vmatpush1.bf16.msra.mxu0 0
    %1475 = vmatprep.mubr.bf16.mxu0 0
    %1476 = vmatmul.mubr.bf16.gmra.mrb[0].mxu0 %v1391
    %v1477 = vpop.f32.mrb[0].mxu0
    %v1478 = vadd.f32 1e-20, %v1477
    %v1479 = vpop.f32.mrb[0].mxu0
    %v1480 = vpop.f32.mrb[0].mxu0
    %v1481 = vadd.f32 1e-20, %v1480
    %v1482 = vpop.f32.mrb[0].mxu0
    %1483 = vdwg.mxu0
    %v1484 = vrcp.pop %v1478
    %v1485 = vrcp.pop %v1481
    %v1486 = vmul.f32 %v1431, %v1484
    %v1487 = vmul.f32 %v1434, %v1485
    %v1488 = vld [vmem:[%s3 + $0x14] sm:$0xf]
    %v1489 = vld [vmem:[%s3 + $0x2c] sm:$0xf]
    %v1490 = vld [vmem:[%s3 + $0x44] sm:$0xf]
    %v1491 = vld [vmem:[%s3 + $0x5c] sm:$0xf]
    %v1492 = vpack.c.bf16 %v1487, %v1486
    %v1497 = vunpack.c.l.b16 %v1488
    %v1498 = vunpack.c.l.b16 %v1489
    %v1499 = vunpack.c.l.b16 %v1490
    %v1500 = vunpack.c.l.b16 %v1491
    %v1501 = vpack.c.b16 %v1498, %v1497
    %v1502 = vpack.c.b16 %v1500, %v1499
    %v1506 = vsel %vm783, %v1492, 0
    %1508 = vmatprep.subr.bf16.mxu0 0
    %1509 = vmatpush1.bf16.msra.mxu0 %v1501
    %1510 = vmatprep.subr.bf16.mxu0 0
    %1511 = vmatpush1.bf16.msra.mxu0 %v1502
    %1512 = vmatprep.subr.bf16.mxu0 0
    %1513 = vmatpush1.bf16.msra.mxu0 0
    %1514 = vmatprep.subr.bf16.mxu0 0
    %1515 = vmatpush1.bf16.msra.mxu0 0
    %1516 = vmatprep.subr.bf16.mxu0 0
    %1517 = vmatpush1.bf16.msra.mxu0 0
    %1518 = vmatprep.subr.bf16.mxu0 0
    %1519 = vmatpush1.bf16.msra.mxu0 0
    %1520 = vmatprep.subr.bf16.mxu0 0
    %1521 = vmatpush1.bf16.msra.mxu0 0
    %1522 = vmatprep.subr.bf16.mxu0 0
    %1523 = vmatpush1.bf16.msra.mxu0 0
    %1524 = vmatprep.subr.bf16.mxu0 0
    %1525 = vmatpush1.bf16.msra.mxu0 0
    %1526 = vmatprep.subr.bf16.mxu0 0
    %1527 = vmatpush1.bf16.msra.mxu0 0
    %1528 = vmatprep.subr.bf16.mxu0 0
    %1529 = vmatpush1.bf16.msra.mxu0 0
    %1530 = vmatprep.subr.bf16.mxu0 0
    %1531 = vmatpush1.bf16.msra.mxu0 0
    %1532 = vmatprep.subr.bf16.mxu0 0
    %1533 = vmatpush1.bf16.msra.mxu0 0
    %1534 = vmatprep.subr.bf16.mxu0 0
    %1535 = vmatpush1.bf16.msra.mxu0 0
    %1536 = vmatprep.subr.bf16.mxu0 0
    %1537 = vmatpush1.bf16.msra.mxu0 0
    %1538 = vmatprep.subr.bf16.mxu0 0
    %1539 = vmatpush1.bf16.msra.mxu0 0
    %1540 = vmatprep.mubr.bf16.mxu0 0
    %1541 = vmatmul.mubr.bf16.gmra.mrb[0].mxu0 %v1506
    %v1542 = vpop.f32.mrb[0].mxu0
    %v1543 = vadd.f32 0.0, %v1542
    %v1544 = vpop.f32.mrb[0].mxu0
    %v1545 = vpop.f32.mrb[0].mxu0
    %v1546 = vadd.f32 0.0, %v1545
    %v1547 = vpop.f32.mrb[0].mxu0
    %1548 = vdwg.mxu0
    %v1549 = vadd.f32 %v1046, %v1543
    %v1550 = vadd.f32 %v1031, %v1546
    %v1551 = vld [vmem:[%s5 + $0xb] sm:$0x1]
    %v1552 = vlaneseq
    %v1553 = vshrl.u32 %v1552, 7
    %v1554 = vsub.s32 0, %v1553
    %v1555 = vrot.slane %v1551, %v1554
    %v1556 = vadd.f32 %v1549, %v1555
    %v1557 = vadd.f32 %v1550, %v1555
    %v1558 = vld [vmem:[%s5 + $0xc] sm:$0x1]
    %v1559 = vld [vmem:[%s5 + $0xd] sm:$0x1]
    %v1560 = vsel %vm783, %v1556, 0.0
    %1561 = vadd.xlane.f32.xlu0 %v1560
    %v1562 = vpop.xlane.xlu0 %1561
    %v1563 = vsel %vm1098, %v1557, 0.0
    %1564 = vadd.xlane.f32.xlu0 %v1563
    %v1565 = vpop.xlane.xlu0 %1564
    %v1566 = vmul.f32 %v1562, %v1102
    %v1567 = vmul.f32 %v1565, %v1102
    %v1568 = vsub.f32 %v1556, %v1566
    %v1569 = vsub.f32 %v1557, %v1567
    %v1570 = vmul.f32 %v1568, %v1568
    %v1571 = vmul.f32 %v1569, %v1569
    %v1572 = vsel %vm783, %v1570, 0.0
    %1573 = vadd.xlane.f32.xlu0 %v1572
    %v1574 = vpop.xlane.xlu0 %1573
    %v1575 = vsel %vm1098, %v1571, 0.0
    %1576 = vadd.xlane.f32.xlu0 %v1575
    %v1577 = vpop.xlane.xlu0 %1576
    %v1578 = vmul.f32 %v1574, %v1102
    %v1579 = vmul.f32 %v1577, %v1102
    %v1580 = vadd.f32 %v1578, 1e-05
    %v1581 = vadd.f32 %v1579, 1e-05
    %v1582 = vrsqrt.pop %v1580
    %v1583 = vrsqrt.pop %v1581
    %v1584 = vmul.f32 %v1568, %v1582
    %v1585 = vmul.f32 %v1569, %v1583
    %v1586 = vlaneseq
    %v1587 = vshrl.u32 %v1586, 7
    %v1588 = vsub.s32 0, %v1587
    %v1589 = vrot.slane %v1558, %v1588
    %v1590 = vmul.f32 %v1584, %v1589
    %v1591 = vmul.f32 %v1585, %v1589
    %v1592 = vlaneseq
    %v1593 = vshrl.u32 %v1592, 7
    %v1594 = vsub.s32 0, %v1593
    %v1595 = vrot.slane %v1559, %v1594
    %v1596 = vadd.f32 %v1590, %v1595
    %v1597 = vadd.f32 %v1591, %v1595
    %v1598 = vld [vmem:[%s3 + $0x4] sm:$0xf]
    %v1599 = vld [vmem:[%s3 + $0x1c] sm:$0xf]
    %v1600 = vld [vmem:[%s3 + $0x34] sm:$0xf]
    %v1601 = vld [vmem:[%s3 + $0x4c] sm:$0xf]
    %v1602 = vpack.c.bf16 %v1597, %v1596
    %v1603 = vld [vmem:[%s5 + $0xe] sm:$0x1]
    %v1604 = vlaneseq
    %v1605 = vshrl.u32 %v1604, 7
    %v1606 = vsub.s32 0, %v1605
    %v1607 = vrot.slane %v1603, %v1606
    %v1612 = vunpack.c.l.b16 %v1598
    %v1613 = vunpack.c.l.b16 %v1599
    %v1614 = vunpack.c.l.b16 %v1600
    %v1615 = vunpack.c.l.b16 %v1601
    %v1616 = vpack.c.b16 %v1613, %v1612
    %v1617 = vpack.c.b16 %v1615, %v1614
    %v1621 = vsel %vm783, %v1602, 0
    %1623 = vmatprep.subr.bf16.mxu0 0
    %1624 = vmatpush1.bf16.msra.mxu0 %v1616
    %1625 = vmatprep.subr.bf16.mxu0 0
    %1626 = vmatpush1.bf16.msra.mxu0 %v1617
    %1627 = vmatprep.subr.bf16.mxu0 0
    %1628 = vmatpush1.bf16.msra.mxu0 0
    %1629 = vmatprep.subr.bf16.mxu0 0
    %1630 = vmatpush1.bf16.msra.mxu0 0
    %1631 = vmatprep.subr.bf16.mxu0 0
    %1632 = vmatpush1.bf16.msra.mxu0 0
    %1633 = vmatprep.subr.bf16.mxu0 0
    %1634 = vmatpush1.bf16.msra.mxu0 0
    %1635 = vmatprep.subr.bf16.mxu0 0
    %1636 = vmatpush1.bf16.msra.mxu0 0
    %1637 = vmatprep.subr.bf16.mxu0 0
    %1638 = vmatpush1.bf16.msra.mxu0 0
    %1639 = vmatprep.subr.bf16.mxu0 0
    %1640 = vmatpush1.bf16.msra.mxu0 0
    %1641 = vmatprep.subr.bf16.mxu0 0
    %1642 = vmatpush1.bf16.msra.mxu0 0
    %1643 = vmatprep.subr.bf16.mxu0 0
    %1644 = vmatpush1.bf16.msra.mxu0 0
    %1645 = vmatprep.subr.bf16.mxu0 0
    %1646 = vmatpush1.bf16.msra.mxu0 0
    %1647 = vmatprep.subr.bf16.mxu0 0
    %1648 = vmatpush1.bf16.msra.mxu0 0
    %1649 = vmatprep.subr.bf16.mxu0 0
    %1650 = vmatpush1.bf16.msra.mxu0 0
    %1651 = vmatprep.subr.bf16.mxu0 0
    %1652 = vmatpush1.bf16.msra.mxu0 0
    %1653 = vmatprep.subr.bf16.mxu0 0
    %1654 = vmatpush1.bf16.msra.mxu0 0
    %1655 = vmatprep.mubr.bf16.mxu0 0
    %1656 = vmatmul.mubr.bf16.gmra.mrb[0].mxu0 %v1621
    %v1657 = vpop.f32.mrb[0].mxu0
    %v1658 = vadd.f32 %v1607, %v1657
    %v1659 = vpop.f32.mrb[0].mxu0
    %v1660 = vpop.f32.mrb[0].mxu0
    %v1661 = vadd.f32 %v1607, %v1660
    %v1662 = vpop.f32.mrb[0].mxu0
    %1663 = vdwg.mxu0
    %v1664 = vmul.f32 %v1658, %v1658
    %v1665 = vmul.f32 %v1661, %v1661
    %v1666 = vmul.f32 %v1658, %v1664
    %v1667 = vmul.f32 %v1661, %v1665
    %v1668 = vmul.f32 %v1666, 0.044715
    %v1669 = vmul.f32 %v1667, 0.044715
    %v1670 = vadd.f32 %v1658, %v1668
    %v1671 = vadd.f32 %v1661, %v1669
    %v1672 = vmul.f32 %v1670, 0.7978846
    %v1673 = vmul.f32 %v1671, 0.7978846
    %v1674 = vtanh.pop %v1672
    %v1675 = vtanh.pop %v1673
    %v1676 = vadd.f32 %v1674, 1.0
    %v1677 = vadd.f32 %v1675, 1.0
    %v1678 = vmul.f32 %v1676, 0.5
    %v1679 = vmul.f32 %v1677, 0.5
    %v1680 = vmul.f32 %v1658, %v1678
    %v1681 = vmul.f32 %v1661, %v1679
    %v1682 = vpack.c.bf16 %v1681, %v1680
    %1683 = vrot.lane.b32.xlu0 %v955, 96
    %v1684 = vpop.permute.xlu0 %1683
    %1685 = vrot.lane.b32.xlu0 %v956, 96
    %v1686 = vpop.permute.xlu0 %1685
    %1687 = vrot.lane.b32.xlu0 %v957, 96
    %v1688 = vpop.permute.xlu0 %1687
    %1689 = vrot.lane.b32.xlu0 %v958, 96
    %v1690 = vpop.permute.xlu0 %1689
    %1691 = vrot.lane.b32.xlu0 %v959, 96
    %v1692 = vpop.permute.xlu0 %1691
    %1693 = vrot.lane.b32.xlu0 %v960, 96
    %v1694 = vpop.permute.xlu0 %1693
    %1695 = vrot.lane.b32.xlu0 %v961, 96
    %v1696 = vpop.permute.xlu0 %1695
    %1697 = vrot.lane.b32.xlu0 %v962, 96
    %v1698 = vpop.permute.xlu0 %1697
    %1707 = vmatprep.subr.bf16.mxu0 0
    %1708 = vmatpush1.bf16.msra.mxu0 %v1684
    %1709 = vmatprep.subr.bf16.mxu0 0
    %1710 = vmatpush1.bf16.msra.mxu0 %v1686
    %1711 = vmatprep.subr.bf16.mxu0 0
    %1712 = vmatpush1.bf16.msra.mxu0 %v1688
    %1713 = vmatprep.subr.bf16.mxu0 0
    %1714 = vmatpush1.bf16.msra.mxu0 %v1690
    %1715 = vmatprep.subr.bf16.mxu0 0
    %1716 = vmatpush1.bf16.msra.mxu0 %v1692
    %1717 = vmatprep.subr.bf16.mxu0 0
    %1718 = vmatpush1.bf16.msra.mxu0 %v1694
    %1719 = vmatprep.subr.bf16.mxu0 0
    %1720 = vmatpush1.bf16.msra.mxu0 %v1696
    %1721 = vmatprep.subr.bf16.mxu0 0
    %1722 = vmatpush1.bf16.msra.mxu0 %v1698
    %1723 = vmatprep.subr.bf16.mxu0 0
    %1724 = vmatpush1.bf16.msra.mxu0 0
    %1725 = vmatprep.subr.bf16.mxu0 0
    %1726 = vmatpush1.bf16.msra.mxu0 0
    %1727 = vmatprep.subr.bf16.mxu0 0
    %1728 = vmatpush1.bf16.msra.mxu0 0
    %1729 = vmatprep.subr.bf16.mxu0 0
    %1730 = vmatpush1.bf16.msra.mxu0 0
    %1731 = vmatprep.subr.bf16.mxu0 0
    %1732 = vmatpush1.bf16.msra.mxu0 0
    %1733 = vmatprep.subr.bf16.mxu0 0
    %1734 = vmatpush1.bf16.msra.mxu0 0
    %1735 = vmatprep.subr.bf16.mxu0 0
    %1736 = vmatpush1.bf16.msra.mxu0 0
    %1737 = vmatprep.subr.bf16.mxu0 0
    %1738 = vmatpush1.bf16.msra.mxu0 0
    %1739 = vmatprep.mubr.bf16.mxu0 0
    %1740 = vmatmul.mubr.bf16.gmra.mrb[0].mxu0 %v1682
    %v1741 = vpop.f32.mrb[0].mxu0
    %v1742 = vadd.f32 0.0, %v1741
    %v1743 = vpop.f32.mrb[0].mxu0
    %v1744 = vpop.f32.mrb[0].mxu0
    %v1745 = vadd.f32 0.0, %v1744
    %v1746 = vpop.f32.mrb[0].mxu0
    %1747 = vdwg.mxu0
    %v1748 = vadd.f32 %v1556, %v1742
    %v1749 = vadd.f32 %v1557, %v1745
    %v1750 = vld [vmem:[%s5 + $0xf] sm:$0x1]
    %v1751 = vlaneseq
    %v1752 = vshrl.u32 %v1751, 7
    %v1753 = vsub.s32 0, %v1752
    %v1754 = vrot.slane %v1750, %v1753
    %v1755 = vadd.f32 %v1748, %v1754
    %v1756 = vadd.f32 %v1749, %v1754
    %v1757 = vld [vmem:[%s5 + $0x10] sm:$0x1]
    %v1758 = vld [vmem:[%s5 + $0x11] sm:$0x1]
    %v1759 = vsel %vm783, %v1755, 0.0
    %1760 = vadd.xlane.f32.xlu0 %v1759
    %v1761 = vpop.xlane.xlu0 %1760
    %v1762 = vsel %vm1098, %v1756, 0.0
    %1763 = vadd.xlane.f32.xlu0 %v1762
    %v1764 = vpop.xlane.xlu0 %1763
    %v1765 = vmul.f32 %v1761, %v1102
    %v1766 = vmul.f32 %v1764, %v1102
    %v1767 = vsub.f32 %v1755, %v1765
    %v1768 = vsub.f32 %v1756, %v1766
    %v1769 = vmul.f32 %v1767, %v1767
    %v1770 = vmul.f32 %v1768, %v1768
    %v1771 = vsel %vm783, %v1769, 0.0
    %1772 = vadd.xlane.f32.xlu0 %v1771
    %v1773 = vpop.xlane.xlu0 %1772
    %v1774 = vsel %vm1098, %v1770, 0.0
    %1775 = vadd.xlane.f32.xlu0 %v1774
    %v1776 = vpop.xlane.xlu0 %1775
    %v1777 = vmul.f32 %v1773, %v1102
    %v1778 = vmul.f32 %v1776, %v1102
    %v1779 = vadd.f32 %v1777, 1e-05
    %v1780 = vadd.f32 %v1778, 1e-05
    %v1781 = vrsqrt.pop %v1779
    %v1782 = vrsqrt.pop %v1780
    %v1783 = vmul.f32 %v1767, %v1781
    %v1784 = vmul.f32 %v1768, %v1782
    %v1785 = vlaneseq
    %v1786 = vshrl.u32 %v1785, 7
    %v1787 = vsub.s32 0, %v1786
    %v1788 = vrot.slane %v1757, %v1787
    %v1789 = vmul.f32 %v1783, %v1788
    %v1790 = vmul.f32 %v1784, %v1788
    %v1791 = vlaneseq
    %v1792 = vshrl.u32 %v1791, 7
    %v1793 = vsub.s32 0, %v1792
    %v1794 = vrot.slane %v1758, %v1793
    %v1795 = vadd.f32 %v1789, %v1794
    %v1796 = vadd.f32 %v1790, %v1794
    %v1797 = vld [vmem:[%s3 + $0xc] sm:$0xff]
    %v1798 = vld [vmem:[%s3 + $0x24] sm:$0xff]
    %v1799 = vld [vmem:[%s3 + $0x3c] sm:$0xff]
    %v1800 = vld [vmem:[%s3 + $0x54] sm:$0xff]
    %v1801 = vpack.c.bf16 %v1796, %v1795
    %v1802 = vld [vmem:[%s5 + $0x12] sm:$0x1]
    %v1803 = vlaneseq
    %v1804 = vshrl.u32 %v1803, 7
    %v1805 = vsub.s32 0, %v1804
    %v1806 = vrot.slane %v1802, %v1805
    %v1811 = vunpack.c.l.b16 %v1797
    %v1812 = vunpack.c.h.b16 %v1797
    %v1813 = vunpack.c.l.b16 %v1798
    %v1814 = vunpack.c.h.b16 %v1798
    %v1815 = vunpack.c.l.b16 %v1799
    %v1816 = vunpack.c.h.b16 %v1799
    %v1817 = vunpack.c.l.b16 %v1800
    %v1818 = vunpack.c.h.b16 %v1800
    %v1819 = vpack.c.b16 %v1813, %v1811
    %v1820 = vpack.c.b16 %v1814, %v1812
    %v1821 = vpack.c.b16 %v1817, %v1815
    %v1822 = vpack.c.b16 %v1818, %v1816
    %1823 = vrot.lane.b32.xlu0 %v1819, 32
    %v1824 = vpop.permute.xlu0 %1823
    %1825 = vrot.lane.b32.xlu0 %v1820, 32
    %v1826 = vpop.permute.xlu0 %1825
    %1827 = vrot.lane.b32.xlu0 %v1821, 32
    %v1828 = vpop.permute.xlu0 %1827
    %1829 = vrot.lane.b32.xlu0 %v1822, 32
    %v1830 = vpop.permute.xlu0 %1829
    %vm1831 = vcmask 261120
    %v1832 = vsel %vm1831, %v1824, %v1826
    %v1833 = vsel %vm1831, %v1828, %v1830
    %v1837 = vsel %vm783, %v1801, 0
    %1839 = vmatprep.subr.bf16.mxu0 0
    %1840 = vmatpush1.bf16.msra.mxu0 %v1832
    %1841 = vmatprep.subr.bf16.mxu0 0
    %1842 = vmatpush1.bf16.msra.mxu0 %v1833
    %1843 = vmatprep.subr.bf16.mxu0 0
    %1844 = vmatpush1.bf16.msra.mxu0 0
    %1845 = vmatprep.subr.bf16.mxu0 0
    %1846 = vmatpush1.bf16.msra.mxu0 0
    %1847 = vmatprep.subr.bf16.mxu0 0
    %1848 = vmatpush1.bf16.msra.mxu0 0
    %1849 = vmatprep.subr.bf16.mxu0 0
    %1850 = vmatpush1.bf16.msra.mxu0 0
    %1851 = vmatprep.subr.bf16.mxu0 0
    %1852 = vmatpush1.bf16.msra.mxu0 0
    %1853 = vmatprep.subr.bf16.mxu0 0
    %1854 = vmatpush1.bf16.msra.mxu0 0
    %1855 = vmatprep.subr.bf16.mxu0 0
    %1856 = vmatpush1.bf16.msra.mxu0 0
    %1857 = vmatprep.subr.bf16.mxu0 0
    %1858 = vmatpush1.bf16.msra.mxu0 0
    %1859 = vmatprep.subr.bf16.mxu0 0
    %1860 = vmatpush1.bf16.msra.mxu0 0
    %1861 = vmatprep.subr.bf16.mxu0 0
    %1862 = vmatpush1.bf16.msra.mxu0 0
    %1863 = vmatprep.subr.bf16.mxu0 0
    %1864 = vmatpush1.bf16.msra.mxu0 0
    %1865 = vmatprep.subr.bf16.mxu0 0
    %1866 = vmatpush1.bf16.msra.mxu0 0
    %1867 = vmatprep.subr.bf16.mxu0 0
    %1868 = vmatpush1.bf16.msra.mxu0 0
    %1869 = vmatprep.subr.bf16.mxu0 0
    %1870 = vmatpush1.bf16.msra.mxu0 0
    %1871 = vmatprep.mubr.bf16.mxu0 0
    %1872 = vmatmul.mubr.bf16.gmra.mrb[0].mxu0 %v1837
    %v1873 = vpop.f32.mrb[0].mxu0
    %v1874 = vadd.f32 %v1806, %v1873
    %v1875 = vpop.f32.mrb[0].mxu0
    %v1876 = vpop.f32.mrb[0].mxu0
    %v1877 = vadd.f32 %v1806, %v1876
    %v1878 = vpop.f32.mrb[0].mxu0
    %1879 = vdwg.mxu0
    %v1880 = vmul.f32 %v1874, 0.35355338
    %v1881 = vmul.f32 %v1877, 0.35355338
    %v1882 = vmul.f32 %v1874, %v1205
    %v1883 = vmul.f32 %v1877, %v1205
    %v1884 = vmul.f32 %v1874, %v1211
    %v1885 = vmul.f32 %v1877, %v1211
    %v1886 = vmul.f32 %v1874, %v1217
    %v1887 = vmul.f32 %v1877, %v1217
    %v1888 = vmul.f32 %v1874, %v1223
    %v1889 = vmul.f32 %v1877, %v1223
    %v1892 = vrot.slane %v1884, 6
    %v1893 = vrot.slane %v1885, 6
    %v1894 = vsel %vm1041, %v1892, %v1893
    %v1899 = vrot.slane %v1886, 4
    %v1900 = vrot.slane %v1887, 4
    %v1901 = vsel %vm1043, %v1899, %v1900
    %v1906 = vrot.slane %v1888, 2
    %v1907 = vrot.slane %v1889, 2
    %v1908 = vsel %vm1045, %v1906, %v1907
    %v1911 = vsel %vm1041, %v1883, %v1892
    %v1912 = vsel %vm1043, %v1894, %v1899
    %v1913 = vsel %vm1045, %v1901, %v1906
    %v1914 = vmul.f32 %v1874, %v1252
    %v1915 = vmul.f32 %v1877, %v1252
    %v1916 = vmul.f32 %v1874, %v1257
    %v1917 = vmul.f32 %v1877, %v1257
    %v1918 = vmul.f32 %v1874, %v1262
    %v1919 = vmul.f32 %v1877, %v1262
    %v1920 = vmul.f32 %v1874, %v1267
    %v1921 = vmul.f32 %v1877, %v1267
    %v1924 = vrot.slane %v1916, 6
    %v1925 = vrot.slane %v1917, 6
    %v1926 = vsel %vm1041, %v1924, %v1925
    %v1931 = vrot.slane %v1918, 4
    %v1932 = vrot.slane %v1919, 4
    %v1933 = vsel %vm1043, %v1931, %v1932
    %v1938 = vrot.slane %v1920, 2
    %v1939 = vrot.slane %v1921, 2
    %v1940 = vsel %vm1045, %v1938, %v1939
    %v1943 = vsel %vm1041, %v1915, %v1924
    %v1944 = vsel %vm1043, %v1926, %v1931
    %v1945 = vsel %vm1045, %v1933, %v1938
    %v1946 = vpack.c.bf16 %v1881, %v1880
    %v1947 = vpack.c.bf16 %v1911, %v1882
    %v1948 = vpack.c.bf16 %v1913, %v1912
    %v1949 = vpack.c.bf16 %v1908, %v1908
    %1953 = vrot.lane.b32.xlu0 %v1947, 96
    %v1954 = vpop.permute.xlu0 %1953
    %1955 = vrot.lane.b32.xlu0 %v1948, 96
    %v1956 = vpop.permute.xlu0 %1955
    %1957 = vrot.lane.b32.xlu0 %v1949, 96
    %v1958 = vpop.permute.xlu0 %1957
    %v1960 = vsel %vm783, %v1946, 0
    %v1963 = vsel %vm783, %v1954, 0
    %v1966 = vsel %vm783, %v1956, 0
    %v1969 = vsel %vm783, %v1958, 0
    %1971 = vmatprep.subr.bf16.mxu0 0
    %1972 = vmatpush1.bf16.xpose.msra.mxu0 %v1963
    %1973 = vmatprep.subr.bf16.mxu0 0
    %1974 = vmatpush1.bf16.xpose.msra.mxu0 %v1966
    %1975 = vmatprep.subr.bf16.mxu0 0
    %1976 = vmatpush1.bf16.xpose.msra.mxu0 %v1969
    %1977 = vmatprep.subr.bf16.mxu0 0
    %1978 = vmatpush1.bf16.xpose.msra.mxu0 0
    %1979 = vmatprep.subr.bf16.mxu0 0
    %1980 = vmatpush1.bf16.xpose.msra.mxu0 0
    %1981 = vmatprep.subr.bf16.mxu0 0
    %1982 = vmatpush1.bf16.xpose.msra.mxu0 0
    %1983 = vmatprep.subr.bf16.mxu0 0
    %1984 = vmatpush1.bf16.xpose.msra.mxu0 0
    %1985 = vmatprep.subr.bf16.mxu0 0
    %1986 = vmatpush1.bf16.xpose.msra.mxu0 0
    %1987 = vmatprep.subr.bf16.mxu0 0
    %1988 = vmatpush1.bf16.xpose.msra.mxu0 0
    %1989 = vmatprep.subr.bf16.mxu0 0
    %1990 = vmatpush1.bf16.xpose.msra.mxu0 0
    %1991 = vmatprep.subr.bf16.mxu0 0
    %1992 = vmatpush1.bf16.xpose.msra.mxu0 0
    %1993 = vmatprep.subr.bf16.mxu0 0
    %1994 = vmatpush1.bf16.xpose.msra.mxu0 0
    %1995 = vmatprep.subr.bf16.mxu0 0
    %1996 = vmatpush1.bf16.xpose.msra.mxu0 0
    %1997 = vmatprep.subr.bf16.mxu0 0
    %1998 = vmatpush1.bf16.xpose.msra.mxu0 0
    %1999 = vmatprep.subr.bf16.mxu0 0
    %2000 = vmatpush1.bf16.xpose.msra.mxu0 0
    %2001 = vmatprep.subr.bf16.mxu0 0
    %2002 = vmatpush1.bf16.xpose.msra.mxu0 0
    %2003 = vmatprep.mubr.bf16.mxu0 0
    %2004 = vmatmul.mubr.bf16.gmra.mrb[0].mxu0 %v1960
    %v2005 = vpop.f32.mrb[0].mxu0
    %v2006 = vadd.f32 %v1091, %v2005
    %v2007 = vpop.f32.mrb[0].mxu0
    %v2008 = vpop.f32.mrb[0].mxu0
    %v2009 = vadd.f32 %v1092, %v2008
    %v2010 = vpop.f32.mrb[0].mxu0
    %2011 = vdwg.mxu0
    %v2012 = vsel %vm1361, %v2006, -inf
    %2013 = vmax.xlane.f32.xlu0 %v2012
    %v2014 = vpop.xlane.xlu0 %2013
    %v2015 = vsel %vm1365, %v2009, -inf
    %2016 = vmax.xlane.f32.xlu0 %v2015
    %v2017 = vpop.xlane.xlu0 %2016
    %v2018 = vsub.f32 %v2006, %v2014
    %v2019 = vsub.f32 %v2009, %v2017
    %v2020 = vmul.f32 %v2018, 1.442695
    %v2021 = vpow.pop %v2020
    %v2022 = vmul.f32 %v2019, 1.442695
    %v2023 = vpow.pop %v2022
    %v2024 = vpack.c.bf16 %v2023, %v2021
    %v2025 = vpack.c.bf16 %v1943, %v1914
    %v2026 = vpack.c.bf16 %v1945, %v1944
    %v2027 = vpack.c.bf16 %v1940, %v1940
    %2031 = vrot.lane.b32.xlu0 %v2025, 64
    %v2032 = vpop.permute.xlu0 %2031
    %2033 = vrot.lane.b32.xlu0 %v2026, 64
    %v2034 = vpop.permute.xlu0 %2033
    %2035 = vrot.lane.b32.xlu0 %v2027, 64
    %v2036 = vpop.permute.xlu0 %2035
    %v2040 = vsel %vm1361, %v2024, 0
    %v2043 = vsel %vm1043, %v2036, 0
    %2045 = vmatprep.subr.bf16.mxu0 0
    %2046 = vmatpush1.bf16.msra.mxu0 %v2032
    %2047 = vmatprep.subr.bf16.mxu0 0
    %2048 = vmatpush1.bf16.msra.mxu0 %v2034
    %2049 = vmatprep.subr.bf16.mxu0 0
    %2050 = vmatpush1.bf16.msra.mxu0 %v2043
    %2051 = vmatprep.subr.bf16.mxu0 0
    %2052 = vmatpush1.bf16.msra.mxu0 0
    %2053 = vmatprep.subr.bf16.mxu0 0
    %2054 = vmatpush1.bf16.msra.mxu0 0
    %2055 = vmatprep.subr.bf16.mxu0 0
    %2056 = vmatpush1.bf16.msra.mxu0 0
    %2057 = vmatprep.subr.bf16.mxu0 0
    %2058 = vmatpush1.bf16.msra.mxu0 0
    %2059 = vmatprep.subr.bf16.mxu0 0
    %2060 = vmatpush1.bf16.msra.mxu0 0
    %2061 = vmatprep.subr.bf16.mxu0 0
    %2062 = vmatpush1.bf16.msra.mxu0 0
    %2063 = vmatprep.subr.bf16.mxu0 0
    %2064 = vmatpush1.bf16.msra.mxu0 0
    %2065 = vmatprep.subr.bf16.mxu0 0
    %2066 = vmatpush1.bf16.msra.mxu0 0
    %2067 = vmatprep.subr.bf16.mxu0 0
    %2068 = vmatpush1.bf16.msra.mxu0 0
    %2069 = vmatprep.subr.bf16.mxu0 0
    %2070 = vmatpush1.bf16.msra.mxu0 0
    %2071 = vmatprep.subr.bf16.mxu0 0
    %2072 = vmatpush1.bf16.msra.mxu0 0
    %2073 = vmatprep.subr.bf16.mxu0 0
    %2074 = vmatpush1.bf16.msra.mxu0 0
    %2075 = vmatprep.subr.bf16.mxu0 0
    %2076 = vmatpush1.bf16.msra.mxu0 0
    %2077 = vmatprep.mubr.bf16.mxu0 0
    %2078 = vmatmul.mubr.bf16.gmra.mrb[0].mxu0 %v2040
    %v2079 = vpop.f32.mrb[0].mxu0
    %v2080 = vadd.f32 0.0, %v2079
    %v2081 = vpop.f32.mrb[0].mxu0
    %v2082 = vpop.f32.mrb[0].mxu0
    %v2083 = vadd.f32 0.0, %v2082
    %v2084 = vpop.f32.mrb[0].mxu0
    %2085 = vdwg.mxu0
    %2086 = vmatprep.subr.bf16.mxu0 0
    %2087 = vmatpush1.bf16.msra.mxu0 %v1437
    %2088 = vmatprep.subr.bf16.mxu0 0
    %2089 = vmatpush1.bf16.msra.mxu0 %v1438
    %2090 = vmatprep.subr.bf16.mxu0 0
    %2091 = vmatpush1.bf16.msra.mxu0 %v1441
    %2092 = vmatprep.subr.bf16.mxu0 0
    %2093 = vmatpush1.bf16.msra.mxu0 0
    %2094 = vmatprep.subr.bf16.mxu0 0
    %2095 = vmatpush1.bf16.msra.mxu0 0
    %2096 = vmatprep.subr.bf16.mxu0 0
    %2097 = vmatpush1.bf16.msra.mxu0 0
    %2098 = vmatprep.subr.bf16.mxu0 0
    %2099 = vmatpush1.bf16.msra.mxu0 0
    %2100 = vmatprep.subr.bf16.mxu0 0
    %2101 = vmatpush1.bf16.msra.mxu0 0
    %2102 = vmatprep.subr.bf16.mxu0 0
    %2103 = vmatpush1.bf16.msra.mxu0 0
    %2104 = vmatprep.subr.bf16.mxu0 0
    %2105 = vmatpush1.bf16.msra.mxu0 0
    %2106 = vmatprep.subr.bf16.mxu0 0
    %2107 = vmatpush1.bf16.msra.mxu0 0
    %2108 = vmatprep.subr.bf16.mxu0 0
    %2109 = vmatpush1.bf16.msra.mxu0 0
    %2110 = vmatprep.subr.bf16.mxu0 0
    %2111 = vmatpush1.bf16.msra.mxu0 0
    %2112 = vmatprep.subr.bf16.mxu0 0
    %2113 = vmatpush1.bf16.msra.mxu0 0
    %2114 = vmatprep.subr.bf16.mxu0 0
    %2115 = vmatpush1.bf16.msra.mxu0 0
    %2116 = vmatprep.subr.bf16.mxu0 0
    %2117 = vmatpush1.bf16.msra.mxu0 0
    %2118 = vmatprep.mubr.bf16.mxu0 0
    %2119 = vmatmul.mubr.bf16.gmra.mrb[0].mxu0 %v2040
    %v2120 = vpop.f32.mrb[0].mxu0
    %v2121 = vadd.f32 1e-20, %v2120
    %v2122 = vpop.f32.mrb[0].mxu0
    %v2123 = vpop.f32.mrb[0].mxu0
    %v2124 = vadd.f32 1e-20, %v2123
    %v2125 = vpop.f32.mrb[0].mxu0
    %2126 = vdwg.mxu0
    %v2127 = vrcp.pop %v2121
    %v2128 = vrcp.pop %v2124
    %v2129 = vmul.f32 %v2080, %v2127
    %v2130 = vmul.f32 %v2083, %v2128
    %v2131 = vpack.c.bf16 %v2130, %v2129
    %2132 = vrot.lane.b32.xlu0 %v1501, 96
    %v2133 = vpop.permute.xlu0 %2132
    %2134 = vrot.lane.b32.xlu0 %v1502, 96
    %v2135 = vpop.permute.xlu0 %2134
    %v2139 = vsel %vm783, %v2131, 0
    %2141 = vmatprep.subr.bf16.mxu0 0
    %2142 = vmatpush1.bf16.msra.mxu0 %v2133
    %2143 = vmatprep.subr.bf16.mxu0 0
    %2144 = vmatpush1.bf16.msra.mxu0 %v2135
    %2145 = vmatprep.subr.bf16.mxu0 0
    %2146 = vmatpush1.bf16.msra.mxu0 0
    %2147 = vmatprep.subr.bf16.mxu0 0
    %2148 = vmatpush1.bf16.msra.mxu0 0
    %2149 = vmatprep.subr.bf16.mxu0 0
    %2150 = vmatpush1.bf16.msra.mxu0 0
    %2151 = vmatprep.subr.bf16.mxu0 0
    %2152 = vmatpush1.bf16.msra.mxu0 0
    %2153 = vmatprep.subr.bf16.mxu0 0
    %2154 = vmatpush1.bf16.msra.mxu0 0
    %2155 = vmatprep.subr.bf16.mxu0 0
    %2156 = vmatpush1.bf16.msra.mxu0 0
    %2157 = vmatprep.subr.bf16.mxu0 0
    %2158 = vmatpush1.bf16.msra.mxu0 0
    %2159 = vmatprep.subr.bf16.mxu0 0
    %2160 = vmatpush1.bf16.msra.mxu0 0
    %2161 = vmatprep.subr.bf16.mxu0 0
    %2162 = vmatpush1.bf16.msra.mxu0 0
    %2163 = vmatprep.subr.bf16.mxu0 0
    %2164 = vmatpush1.bf16.msra.mxu0 0
    %2165 = vmatprep.subr.bf16.mxu0 0
    %2166 = vmatpush1.bf16.msra.mxu0 0
    %2167 = vmatprep.subr.bf16.mxu0 0
    %2168 = vmatpush1.bf16.msra.mxu0 0
    %2169 = vmatprep.subr.bf16.mxu0 0
    %2170 = vmatpush1.bf16.msra.mxu0 0
    %2171 = vmatprep.subr.bf16.mxu0 0
    %2172 = vmatpush1.bf16.msra.mxu0 0
    %2173 = vmatprep.mubr.bf16.mxu0 0
    %2174 = vmatmul.mubr.bf16.gmra.mrb[0].mxu0 %v2139
    %v2175 = vpop.f32.mrb[0].mxu0
    %v2176 = vadd.f32 0.0, %v2175
    %v2177 = vpop.f32.mrb[0].mxu0
    %v2178 = vpop.f32.mrb[0].mxu0
    %v2179 = vadd.f32 0.0, %v2178
    %v2180 = vpop.f32.mrb[0].mxu0
    %2181 = vdwg.mxu0
    %v2182 = vadd.f32 %v1755, %v2176
    %v2183 = vadd.f32 %v1756, %v2179
    %v2184 = vld [vmem:[%s5 + $0x13] sm:$0x1]
    %v2185 = vlaneseq
    %v2186 = vshrl.u32 %v2185, 7
    %v2187 = vsub.s32 0, %v2186
    %v2188 = vrot.slane %v2184, %v2187
    %v2189 = vadd.f32 %v2182, %v2188
    %v2190 = vadd.f32 %v2183, %v2188
    %v2191 = vld [vmem:[%s5 + $0x14] sm:$0x1]
    %v2192 = vld [vmem:[%s5 + $0x15] sm:$0x1]
    %v2193 = vsel %vm783, %v2189, 0.0
    %2194 = vadd.xlane.f32.xlu0 %v2193
    %v2195 = vpop.xlane.xlu0 %2194
    %v2196 = vsel %vm1098, %v2190, 0.0
    %2197 = vadd.xlane.f32.xlu0 %v2196
    %v2198 = vpop.xlane.xlu0 %2197
    %v2199 = vmul.f32 %v2195, %v1102
    %v2200 = vmul.f32 %v2198, %v1102
    %v2201 = vsub.f32 %v2189, %v2199
    %v2202 = vsub.f32 %v2190, %v2200
    %v2203 = vmul.f32 %v2201, %v2201
    %v2204 = vmul.f32 %v2202, %v2202
    %v2205 = vsel %vm783, %v2203, 0.0
    %2206 = vadd.xlane.f32.xlu0 %v2205
    %v2207 = vpop.xlane.xlu0 %2206
    %v2208 = vsel %vm1098, %v2204, 0.0
    %2209 = vadd.xlane.f32.xlu0 %v2208
    %v2210 = vpop.xlane.xlu0 %2209
    %v2211 = vmul.f32 %v2207, %v1102
    %v2212 = vmul.f32 %v2210, %v1102
    %v2213 = vadd.f32 %v2211, 1e-05
    %v2214 = vadd.f32 %v2212, 1e-05
    %v2215 = vrsqrt.pop %v2213
    %v2216 = vrsqrt.pop %v2214
    %v2217 = vmul.f32 %v2201, %v2215
    %v2218 = vmul.f32 %v2202, %v2216
    %v2219 = vlaneseq
    %v2220 = vshrl.u32 %v2219, 7
    %v2221 = vsub.s32 0, %v2220
    %v2222 = vrot.slane %v2191, %v2221
    %v2223 = vmul.f32 %v2217, %v2222
    %v2224 = vmul.f32 %v2218, %v2222
    %v2225 = vlaneseq
    %v2226 = vshrl.u32 %v2225, 7
    %v2227 = vsub.s32 0, %v2226
    %v2228 = vrot.slane %v2192, %v2227
    %v2229 = vadd.f32 %v2223, %v2228
    %v2230 = vadd.f32 %v2224, %v2228
    %v2231 = vld [vmem:[%s3 + $0x8] sm:$0xf]
    %v2232 = vld [vmem:[%s3 + $0x20] sm:$0xf]
    %v2233 = vld [vmem:[%s3 + $0x38] sm:$0xf]
    %v2234 = vld [vmem:[%s3 + $0x50] sm:$0xf]
    %v2235 = vpack.c.bf16 %v2230, %v2229
    %v2236 = vld [vmem:[%s5 + $0x16] sm:$0x1]
    %v2237 = vlaneseq
    %v2238 = vshrl.u32 %v2237, 7
    %v2239 = vsub.s32 0, %v2238
    %v2240 = vrot.slane %v2236, %v2239
    %v2245 = vunpack.c.l.b16 %v2231
    %v2246 = vunpack.c.l.b16 %v2232
    %v2247 = vunpack.c.l.b16 %v2233
    %v2248 = vunpack.c.l.b16 %v2234
    %v2249 = vpack.c.b16 %v2246, %v2245
    %v2250 = vpack.c.b16 %v2248, %v2247
    %v2254 = vsel %vm783, %v2235, 0
    %2256 = vmatprep.subr.bf16.mxu0 0
    %2257 = vmatpush1.bf16.msra.mxu0 %v2249
    %2258 = vmatprep.subr.bf16.mxu0 0
    %2259 = vmatpush1.bf16.msra.mxu0 %v2250
    %2260 = vmatprep.subr.bf16.mxu0 0
    %2261 = vmatpush1.bf16.msra.mxu0 0
    %2262 = vmatprep.subr.bf16.mxu0 0
    %2263 = vmatpush1.bf16.msra.mxu0 0
    %2264 = vmatprep.subr.bf16.mxu0 0
    %2265 = vmatpush1.bf16.msra.mxu0 0
    %2266 = vmatprep.subr.bf16.mxu0 0
    %2267 = vmatpush1.bf16.msra.mxu0 0
    %2268 = vmatprep.subr.bf16.mxu0 0
    %2269 = vmatpush1.bf16.msra.mxu0 0
    %2270 = vmatprep.subr.bf16.mxu0 0
    %2271 = vmatpush1.bf16.msra.mxu0 0
    %2272 = vmatprep.subr.bf16.mxu0 0
    %2273 = vmatpush1.bf16.msra.mxu0 0
    %2274 = vmatprep.subr.bf16.mxu0 0
    %2275 = vmatpush1.bf16.msra.mxu0 0
    %2276 = vmatprep.subr.bf16.mxu0 0
    %2277 = vmatpush1.bf16.msra.mxu0 0
    %2278 = vmatprep.subr.bf16.mxu0 0
    %2279 = vmatpush1.bf16.msra.mxu0 0
    %2280 = vmatprep.subr.bf16.mxu0 0
    %2281 = vmatpush1.bf16.msra.mxu0 0
    %2282 = vmatprep.subr.bf16.mxu0 0
    %2283 = vmatpush1.bf16.msra.mxu0 0
    %2284 = vmatprep.subr.bf16.mxu0 0
    %2285 = vmatpush1.bf16.msra.mxu0 0
    %2286 = vmatprep.subr.bf16.mxu0 0
    %2287 = vmatpush1.bf16.msra.mxu0 0
    %2288 = vmatprep.mubr.bf16.mxu0 0
    %2289 = vmatmul.mubr.bf16.gmra.mrb[0].mxu0 %v2254
    %v2290 = vpop.f32.mrb[0].mxu0
    %v2291 = vadd.f32 %v2240, %v2290
    %v2292 = vpop.f32.mrb[0].mxu0
    %v2293 = vpop.f32.mrb[0].mxu0
    %v2294 = vadd.f32 %v2240, %v2293
    %v2295 = vpop.f32.mrb[0].mxu0
    %2296 = vdwg.mxu0
    %v2297 = vmul.f32 %v2291, %v2291
    %v2298 = vmul.f32 %v2294, %v2294
    %v2299 = vmul.f32 %v2291, %v2297
    %v2300 = vmul.f32 %v2294, %v2298
    %v2301 = vmul.f32 %v2299, 0.044715
    %v2302 = vmul.f32 %v2300, 0.044715
    %v2303 = vadd.f32 %v2291, %v2301
    %v2304 = vadd.f32 %v2294, %v2302
    %v2305 = vmul.f32 %v2303, 0.7978846
    %v2306 = vmul.f32 %v2304, 0.7978846
    %v2307 = vtanh.pop %v2305
    %v2308 = vtanh.pop %v2306
    %v2309 = vadd.f32 %v2307, 1.0
    %v2310 = vadd.f32 %v2308, 1.0
    %v2311 = vmul.f32 %v2309, 0.5
    %v2312 = vmul.f32 %v2310, 0.5
    %v2313 = vmul.f32 %v2291, %v2311
    %v2314 = vmul.f32 %v2294, %v2312
    %v2315 = vpack.c.bf16 %v2314, %v2313
    %2316 = vrot.lane.b32.xlu0 %v955, 64
    %v2317 = vpop.permute.xlu0 %2316
    %2318 = vrot.lane.b32.xlu0 %v956, 64
    %v2319 = vpop.permute.xlu0 %2318
    %2320 = vrot.lane.b32.xlu0 %v957, 64
    %v2321 = vpop.permute.xlu0 %2320
    %2322 = vrot.lane.b32.xlu0 %v958, 64
    %v2323 = vpop.permute.xlu0 %2322
    %2324 = vrot.lane.b32.xlu0 %v959, 64
    %v2325 = vpop.permute.xlu0 %2324
    %2326 = vrot.lane.b32.xlu0 %v960, 64
    %v2327 = vpop.permute.xlu0 %2326
    %2328 = vrot.lane.b32.xlu0 %v961, 64
    %v2329 = vpop.permute.xlu0 %2328
    %2330 = vrot.lane.b32.xlu0 %v962, 64
    %v2331 = vpop.permute.xlu0 %2330
    %2340 = vmatprep.subr.bf16.mxu0 0
    %2341 = vmatpush1.bf16.msra.mxu0 %v2317
    %2342 = vmatprep.subr.bf16.mxu0 0
    %2343 = vmatpush1.bf16.msra.mxu0 %v2319
    %2344 = vmatprep.subr.bf16.mxu0 0
    %2345 = vmatpush1.bf16.msra.mxu0 %v2321
    %2346 = vmatprep.subr.bf16.mxu0 0
    %2347 = vmatpush1.bf16.msra.mxu0 %v2323
    %2348 = vmatprep.subr.bf16.mxu0 0
    %2349 = vmatpush1.bf16.msra.mxu0 %v2325
    %2350 = vmatprep.subr.bf16.mxu0 0
    %2351 = vmatpush1.bf16.msra.mxu0 %v2327
    %2352 = vmatprep.subr.bf16.mxu0 0
    %2353 = vmatpush1.bf16.msra.mxu0 %v2329
    %2354 = vmatprep.subr.bf16.mxu0 0
    %2355 = vmatpush1.bf16.msra.mxu0 %v2331
    %2356 = vmatprep.subr.bf16.mxu0 0
    %2357 = vmatpush1.bf16.msra.mxu0 0
    %2358 = vmatprep.subr.bf16.mxu0 0
    %2359 = vmatpush1.bf16.msra.mxu0 0
    %2360 = vmatprep.subr.bf16.mxu0 0
    %2361 = vmatpush1.bf16.msra.mxu0 0
    %2362 = vmatprep.subr.bf16.mxu0 0
    %2363 = vmatpush1.bf16.msra.mxu0 0
    %2364 = vmatprep.subr.bf16.mxu0 0
    %2365 = vmatpush1.bf16.msra.mxu0 0
    %2366 = vmatprep.subr.bf16.mxu0 0
    %2367 = vmatpush1.bf16.msra.mxu0 0
    %2368 = vmatprep.subr.bf16.mxu0 0
    %2369 = vmatpush1.bf16.msra.mxu0 0
    %2370 = vmatprep.subr.bf16.mxu0 0
    %2371 = vmatpush1.bf16.msra.mxu0 0
    %2372 = vmatprep.mubr.bf16.mxu0 0
    %2373 = vmatmul.mubr.bf16.gmra.mrb[0].mxu0 %v2315
    %v2374 = vpop.f32.mrb[0].mxu0
    %v2375 = vpop.f32.mrb[0].mxu0
    %v2376 = vpop.f32.mrb[0].mxu0
    %v2377 = vadd.f32 0.0, %v2376
    %v2378 = vpop.f32.mrb[0].mxu0
    %2379 = vdwg.mxu0
    %v2380 = vadd.f32 %v2190, %v2377
    %v2381 = vld [vmem:[%s5 + $0x17] sm:$0x1]
    %v2382 = vlaneseq
    %v2383 = vshrl.u32 %v2382, 7
    %v2384 = vsub.s32 0, %v2383
    %v2385 = vrot.slane %v2381, %v2384
    %v2386 = vadd.f32 %v2380, %v2385
    %v2387 = vld [vmem:[%s5 + $0x5] sm:$0x1]
    %v2388 = vld [vmem:[%s5 + $0x6] sm:$0x1]
    %v2389 = vsel %vm1098, %v2386, 0.0
    %2390 = vadd.xlane.f32.xlu0 %v2389
    %v2391 = vpop.xlane.xlu0 %2390
    %v2392 = vmul.f32 %v2391, %v1102
    %v2393 = vsub.f32 %v2386, %v2392
    %v2394 = vmul.f32 %v2393, %v2393
    %v2395 = vsel %vm1098, %v2394, 0.0
    %2396 = vadd.xlane.f32.xlu0 %v2395
    %v2397 = vpop.xlane.xlu0 %2396
    %v2398 = vmul.f32 %v2397, %v1102
    %v2399 = vadd.f32 %v2398, 1e-05
    %v2400 = vrsqrt.pop %v2399
    %v2401 = vmul.f32 %v2393, %v2400
    %v2402 = vlaneseq
    %v2403 = vshrl.u32 %v2402, 7
    %v2404 = vsub.s32 0, %v2403
    %v2405 = vrot.slane %v2387, %v2404
    %v2406 = vmul.f32 %v2401, %v2405
    %v2407 = vlaneseq
    %v2408 = vshrl.u32 %v2407, 7
    %v2409 = vsub.s32 0, %v2408
    %v2410 = vrot.slane %v2388, %v2409
    %v2411 = vadd.f32 %v2406, %v2410
    %v2412 = vpack.c.bf16 %v2411, %v2411
    %v2413 = vld [vmem:[%s5 + $0x7] sm:$0x1]
    %v2414 = vlaneseq
    %v2415 = vshrl.u32 %v2414, 7
    %v2416 = vsub.s32 0, %v2415
    %v2417 = vrot.slane %v2413, %v2416
    %2418 = vrot.lane.b32.xlu0 %v775, 64
    %v2419 = vpop.permute.xlu0 %2418
    %2420 = vrot.lane.b32.xlu0 %v776, 64
    %v2421 = vpop.permute.xlu0 %2420
    %v2425 = vsel %vm783, %v2412, 0
    %2427 = vmatprep.subr.bf16.mxu0 0
    %2428 = vmatpush1.bf16.msra.mxu0 %v2419
    %2429 = vmatprep.subr.bf16.mxu0 0
    %2430 = vmatpush1.bf16.msra.mxu0 %v2421
    %2431 = vmatprep.subr.bf16.mxu0 0
    %2432 = vmatpush1.bf16.msra.mxu0 0
    %2433 = vmatprep.subr.bf16.mxu0 0
    %2434 = vmatpush1.bf16.msra.mxu0 0
    %2435 = vmatprep.subr.bf16.mxu0 0
    %2436 = vmatpush1.bf16.msra.mxu0 0
    %2437 = vmatprep.subr.bf16.mxu0 0
    %2438 = vmatpush1.bf16.msra.mxu0 0
    %2439 = vmatprep.subr.bf16.mxu0 0
    %2440 = vmatpush1.bf16.msra.mxu0 0
    %2441 = vmatprep.subr.bf16.mxu0 0
    %2442 = vmatpush1.bf16.msra.mxu0 0
    %2443 = vmatprep.subr.bf16.mxu0 0
    %2444 = vmatpush1.bf16.msra.mxu0 0
    %2445 = vmatprep.subr.bf16.mxu0 0
    %2446 = vmatpush1.bf16.msra.mxu0 0
    %2447 = vmatprep.subr.bf16.mxu0 0
    %2448 = vmatpush1.bf16.msra.mxu0 0
    %2449 = vmatprep.subr.bf16.mxu0 0
    %2450 = vmatpush1.bf16.msra.mxu0 0
    %2451 = vmatprep.subr.bf16.mxu0 0
    %2452 = vmatpush1.bf16.msra.mxu0 0
    %2453 = vmatprep.subr.bf16.mxu0 0
    %2454 = vmatpush1.bf16.msra.mxu0 0
    %2455 = vmatprep.subr.bf16.mxu0 0
    %2456 = vmatpush1.bf16.msra.mxu0 0
    %2457 = vmatprep.subr.bf16.mxu0 0
    %2458 = vmatpush1.bf16.msra.mxu0 0
    %2459 = vmatprep.mubr.bf16.mxu0 0
    %2460 = vmatmul.mubr.bf16.gmra.mrb[0].mxu0 %v2425
    %v2461 = vpop.f32.mrb[0].mxu0
    %v2462 = vadd.f32 %v2417, %v2461
    %v2463 = vpop.f32.mrb[0].mxu0
    %v2464 = vpop.f32.mrb[0].mxu0
    %v2465 = vpop.f32.mrb[0].mxu0
    %2466 = vdwg.mxu0
    %v2467 = vsub.f32 %v2462, %v752
    %v2468 = vmul.f32 %v2467, %v2467
    %v2469 = vsel %vm1098, %v2468, 0.0
    %2470 = vadd.xlane.f32.xlu0 %v2469
    %v2471 = vpop.xlane.xlu0 %2470
    %v2472 = vrot.slane %v2471, 4
    %v2473 = vadd.f32 %v2471, %v2472
    %v2474 = vrot.slane %v2473, 2
    %v2475 = vadd.f32 %v2473, %v2474
    %v2476 = vrot.slane %v2475, 1
    %v2477 = vadd.f32 %v2475, %v2476
    %s2478 = vtos %v2477
    %v2479 = vrcp.pop 64.0
    %s2480 = vtos %v2479
    %s2481 = smul.f32 %s2478, %s2480
    %s2482 = scalar_lea.smem [#allocation2], 0
    %2483 = sst [smem:[%s2482]] %s2481
    // Predicated region
    $region26: #{tpu_custom_call.1} parent=1 // pred_check
      _
    $region27: #{tpu_custom_call.1} parent=1 // pred_check_branch
      %2485 = sbr.rel (0) target = $region29
    $region28: #{tpu_custom_call.1} parent=1 // pred_region
      %s2487 = ssub.s32 16, 16
      %2488 = vsyncadd [#allocation3], %s2487
      %2491 = dma.smem_to_hbm [#allocation2], 16, %s6, [#allocation3]
    $region29: #{tpu_custom_call.1} parent=1 // pred_fallthru
      _
    // Predicated region
    $region30: #{tpu_custom_call.1} parent=1 // pred_check
      _
    $region31: #{tpu_custom_call.1} parent=1 // pred_check_branch
      %2493 = sbr.rel (0) target = $region33
    $region32: #{tpu_custom_call.1} parent=1 // pred_region
      %2494 = dma.done [#allocation3], 16
    $region33: #{tpu_custom_call.1} parent=1 // pred_fallthru
      _
    %2495 = sfence
    %2496 = vsyncpa [#allocation3], 1

</llo_original>
